<compile_context>
chip_gen: v5e
topology: v5e:2x2
jax: 0.10.0
libtpu: 0.0.40
codegen_flags: <defaults>
</compile_context>

<pallas_src>
import jax
import jax.numpy as jnp
from jax import lax
from jax.experimental import pallas as pl
from jax.experimental.pallas import tpu as pltpu

BN_EPS = 1e-5


def _bn_relu(y, gamma, beta):
    """BatchNorm1d (training mode, biased batch var) + ReLU, two-pass variance."""
    mu = jnp.mean(y, axis=0, keepdims=True)
    var = jnp.mean(jnp.square(y - mu), axis=0, keepdims=True)
    y_hat = (y - mu) * lax.rsqrt(var + BN_EPS)
    return jnp.maximum(y_hat * gamma + beta, 0.0)


def _linear_bn_relu(h, w, gamma, beta):
    # Pre-BN bias omitted: it cancels exactly inside BatchNorm.
    y = jnp.dot(h.astype(jnp.bfloat16), w.astype(jnp.bfloat16),
                preferred_element_type=jnp.float32)
    return _bn_relu(y, gamma, beta)


def encoder_kernel(x_ref, w1_ref, part_ref, acc_ref):
    """Partial layer-1 matmul: reduce the K tiles owned by this grid column.

    Grid = (n_split, n_k): the leading axis is "parallel" (sharded across both
    TensorCores on v7x); n_k is the per-core K reduction into the f32 accumulator.
    x is read as f32 from HBM and cast to bf16 in VMEM (no wrapper cast pass).
    """
    k = pl.program_id(1)

    @pl.when(k == 0)
    def _():
        acc_ref[...] = jnp.zeros_like(acc_ref)

    acc_ref[...] += jnp.dot(x_ref[...].astype(jnp.bfloat16),
                            w1_ref[...].astype(jnp.bfloat16),
                            preferred_element_type=jnp.float32)

    @pl.when(k == pl.num_programs(1) - 1)
    def _():
        part_ref[0] = acc_ref[...]


def decoder_kernel(part_ref, g1_ref, bt1_ref, w2_ref, g2_ref, bt2_ref,
                   w3_ref, g3_ref, bt3_ref, w4_ref, b4_ref, mean_ref):
    """Combine layer-1 partials, run BN + layers 2-3 (tiny; recomputed per tile and
    hidden under the W4/mean DMA), then layer 4 + exp for one D tile.

    Grid = (n_d,), "parallel": lane-dense bf16 mean stores, both TCs used on v7x.
    """
    y1 = part_ref[0]
    for c in range(1, part_ref.shape[0]):          # static n_split (1 or 2)
        y1 = y1 + part_ref[c]

    h = _bn_relu(y1, g1_ref[...], bt1_ref[...])                     # layer 1 epilogue
    h = _linear_bn_relu(h, w2_ref[...], g2_ref[...], bt2_ref[...])  # layer 2
    h = _linear_bn_relu(h, w3_ref[...], g3_ref[...], bt3_ref[...])  # layer 3

    log_mean = jnp.dot(h.astype(jnp.bfloat16), w4_ref[...].astype(jnp.bfloat16),
                       preferred_element_type=jnp.float32) + b4_ref[...]
    mean_ref[...] = jnp.exp(log_mean).astype(mean_ref.dtype)


def _pick_tile(dim, requested):
    """Largest multiple of 128 that divides `dim` and is <= requested."""
    t = max(128, min(requested, dim))
    t -= t % 128
    while dim % t:
        t -= 128
    return t


def prepare_params(params):
    """One-time (outside jit) bf16 conversion of the matmul weights so the kernels
    read 2 B/elt from HBM for the dominant W1/W4 reads."""
    out = dict(params)
    for name in ("w1", "w2", "w3", "w4"):
        out[name] = params[name].astype(jnp.bfloat16)
    return out


def deep_count_autoencoder(x, params, *, d_tile=512, mean_dtype=jnp.bfloat16):
    """Full DCA forward. x: (B, D) f32. Returns (dispersion (D,) f32, mean (B, D))."""
    B, D = x.shape
    assert D % 128 == 0, "pad the feature axis to a multiple of 128"
    d_tile = _pick_tile(D, d_tile)
    n_d = D // d_tile
    # Shard the layer-1 D reduction across both v7x TensorCores when the tile count
    # splits evenly (harmless on single-core v5e/v6e: same total K tiles).
    n_split = 2 if n_d % 2 == 0 else 1
    n_k = n_d // n_split

    w1, w2, w3, w4 = params["w1"], params["w2"], params["w3"], params["w4"]
    g1, g2, g3 = params["g1"], params["g2"], params["g3"]
    bt1, bt2, bt3 = params["bt1"], params["bt2"], params["bt3"]
    b4 = params["b4"]
    h1, h2, h3 = w1.shape[1], w2.shape[1], w3.shape[1]   # 64, 32, 64

    # --- layer 1 partial sums: K-reduction over D, split across cores -----------
    partials = pl.pallas_call(
        encoder_kernel,
        grid=(n_split, n_k),
        in_specs=[
            pl.BlockSpec((B, d_tile), lambda c, k: (0, c * n_k + k)),   # x tile (f32)
            pl.BlockSpec((d_tile, h1), lambda c, k: (c * n_k + k, 0)),  # W1 tile (bf16)
        ],
        out_specs=pl.BlockSpec((1, B, h1), lambda c, k: (c, 0, 0)),
        out_shape=jax.ShapeDtypeStruct((n_split, B, h1), jnp.float32),
        scratch_shapes=[pltpu.VMEM((B, h1), jnp.float32)],
        compiler_params=pltpu.CompilerParams(
            dimension_semantics=("parallel", "arbitrary")),
    )(x, w1)

    # --- combine + BN/layers 2-3 + layer 4 + exp: independent D output tiles ----
    def const(shape):
        return pl.BlockSpec(shape, lambda j: (0,) * len(shape))

    mean = pl.pallas_call(
        decoder_kernel,
        grid=(n_d,),
        in_specs=[
            const((n_split, B, h1)),                              # layer-1 partials
            const((1, h1)), const((1, h1)),                       # gamma1, beta1
            const((h1, h2)), const((1, h2)), const((1, h2)),      # W2, gamma2, beta2
            const((h2, h3)), const((1, h3)), const((1, h3)),      # W3, gamma3, beta3
            pl.BlockSpec((h3, d_tile), lambda j: (0, j)),         # W4 tile
            pl.BlockSpec((1, d_tile), lambda j: (0, j)),          # b4 tile
        ],
        out_specs=pl.BlockSpec((B, d_tile), lambda j: (0, j)),    # lane-dense stores
        out_shape=jax.ShapeDtypeStruct((B, D), mean_dtype),
        compiler_params=pltpu.CompilerParams(
            dimension_semantics=("parallel",)),
    )(partials, g1, bt1, w2, g2, bt2, w3, g3, bt3, w4, b4)

    # Batch-independent scalar-vector work stays out of the kernels.
    dispersion = jnp.exp(params["log_dispersion"])
    return dispersion, mean


def init_params(key, input_size, encoder_sizes=(64, 32), decoder_sizes=(64,)):
    """Synthetic init mirroring the PyTorch module's parameter shapes."""
    sizes = [input_size, *encoder_sizes, *decoder_sizes, input_size]
    keys = jax.random.split(key, 2 * (len(sizes) - 1) + 1)
    params = {}
    for li, (fan_in, fan_out) in enumerate(zip(sizes[:-1], sizes[1:]), start=1):
        kw, kb = keys[2 * (li - 1)], keys[2 * (li - 1) + 1]
        # weights stored transposed: (in, out) so kernels compute y = x @ W
        params[f"w{li}"] = (jax.random.normal(kw, (fan_in, fan_out), jnp.float32)
                            / jnp.sqrt(fan_in))
        params[f"b{li}"] = jax.random.normal(kb, (1, fan_out), jnp.float32) * 0.01
        if li <= 3:  # BatchNorm affine params (PyTorch init: gamma=1, beta=0)
            params[f"g{li}"] = jnp.ones((1, fan_out), jnp.float32)
            params[f"bt{li}"] = jnp.zeros((1, fan_out), jnp.float32)
    params["log_dispersion"] = jax.random.normal(keys[-1], (input_size,), jnp.float32)
    return params


def reference_forward(x, params, matmul_dtype):
    """Pure-JAX reference with full module semantics (incl. pre-BN biases).

    matmul_dtype=bf16 mirrors the kernels' MXU precision; f32 is the exact module."""
    def dot(a, w):
        return jnp.dot(a.astype(matmul_dtype), w.astype(matmul_dtype),
                       preferred_element_type=jnp.float32)

    def blk(h, w, b, g, bt):
        y = dot(h, w) + b
        mu = jnp.mean(y, axis=0, keepdims=True)
        var = jnp.mean((y - mu) ** 2, axis=0, keepdims=True)
        return jnp.maximum((y - mu) / jnp.sqrt(var + BN_EPS) * g + bt, 0.0)

    h = blk(x, params["w1"], params["b1"], params["g1"], params["bt1"])
    h = blk(h, params["w2"], params["b2"], params["g2"], params["bt2"])
    h = blk(h, params["w3"], params["b3"], params["g3"], params["bt3"])
    log_mean = dot(h, params["w4"]) + params["b4"]
    return jnp.exp(params["log_dispersion"]), jnp.exp(log_mean)


if __name__ == "__main__":
    B, D = 128, 256          # batch, input_size (genes); D a multiple of 128
    key = jax.random.PRNGKey(0)
    kx, kp = jax.random.split(key)
    x = jax.random.normal(kx, (B, D), jnp.float32) * 0.5
    params = init_params(kp, D)
    run_params = prepare_params(params)        # bf16 weights, once, outside jit

    fwd = jax.jit(deep_count_autoencoder)
    dispersion, mean = jax.block_until_ready(fwd(x, run_params))
    assert dispersion.shape == (D,) and mean.shape == (B, D)
    mean_f32 = mean.astype(jnp.float32)

    # (a) reference at the kernels' matmul precision (bf16 MXU inputs, f32 accumulate);
    #     tolerance also covers the bf16 rounding of the mean output store.
    ref_disp, ref_mean = reference_forward(x, params, jnp.bfloat16)
    assert jnp.allclose(dispersion, ref_disp, atol=1e-5, rtol=1e-5)
    assert jnp.allclose(mean_f32, ref_mean, atol=1e-2, rtol=1e-2)

    # (b) exact f32 module semantics (bf16 matmuls + bf16 output ~1% through exp()).
    _, ref_mean_f32 = reference_forward(x, params, jnp.float32)
    assert jnp.allclose(mean_f32, ref_mean_f32, atol=2e-2, rtol=5e-2)

    # Also exercise the multi-tile / two-TensorCore-split path (n_d=2, n_split=2).
    _, mean_split = jax.block_until_ready(
        deep_count_autoencoder(x, run_params, d_tile=128))
    assert jnp.allclose(mean_split.astype(jnp.float32), ref_mean, atol=1e-2, rtol=1e-2)

    print("KERNEL_OK")
</pallas_src>

<mosaic_0001>
module attributes {stable_mosaic.version = 11 : i64} {
  func.func @encoder_kernel(%arg0: i32, %arg1: i32, %arg2: memref<128x256xf32, #tpu.memory_space<vmem>>, %arg3: memref<256x64xbf16, #tpu.memory_space<vmem>>, %arg4: memref<1x128x64xf32, #tpu.memory_space<vmem>>, %arg5: memref<128x64xf32, #tpu.memory_space<vmem>>) attributes {dimension_semantics = [#tpu.dimension_semantics<parallel>, #tpu.dimension_semantics<arbitrary>], iteration_bounds = array<i64: 1, 1>, scalar_prefetch = 0 : i64, scratch_operands = 1 : i64, tpu.core_type = #tpu.core_type<tc>, window_params = [{transform_indices = @transform_0, window_bounds = array<i64: 128, 256>}, {transform_indices = @transform_1, window_bounds = array<i64: 256, 64>}, {transform_indices = @transform_2, window_bounds = array<i64: 1, 128, 64>}]} {
    %c0_i32 = arith.constant 0 : i32
    %0 = arith.cmpi eq, %arg1, %c0_i32 : i32
    %1 = arith.extui %0 : i1 to i32
    %c0_i32_0 = arith.constant 0 : i32
    %2 = arith.cmpi ne, %1, %c0_i32_0 : i32
    scf.if %2 {
      %cst_10 = arith.constant 0.000000e+00 : f32
      %13 = vector.broadcast %cst_10 : f32 to vector<128x64xf32>
      %c0_11 = arith.constant 0 : index
      %c0_12 = arith.constant 0 : index
      %14 = vector.load %arg5[%c0_11, %c0_12] : memref<128x64xf32, #tpu.memory_space<vmem>>, vector<128x64xf32>
      tpu.vector_store %arg5[%c0_11, %c0_12], %13 {strides = array<i32>} : memref<128x64xf32, #tpu.memory_space<vmem>>, vector<128x64xf32>,
    } else {
    }
    %c0 = arith.constant 0 : index
    %c0_1 = arith.constant 0 : index
    %3 = vector.load %arg5[%c0, %c0_1] : memref<128x64xf32, #tpu.memory_space<vmem>>, vector<128x64xf32>
    %c0_2 = arith.constant 0 : index
    %c0_3 = arith.constant 0 : index
    %4 = vector.load %arg2[%c0_2, %c0_3] : memref<128x256xf32, #tpu.memory_space<vmem>>, vector<128x256xf32>
    %5 = arith.truncf %4 : vector<128x256xf32> to vector<128x256xbf16>
    %c0_4 = arith.constant 0 : index
    %c0_5 = arith.constant 0 : index
    %6 = vector.load %arg3[%c0_4, %c0_5] : memref<256x64xbf16, #tpu.memory_space<vmem>>, vector<256x64xbf16>
    %cst = arith.constant dense<0.000000e+00> : vector<128x64xf32>
    %7 = tpu.matmul %5, %6, %cst {dimension_numbers = #tpu.dot_dimension_numbers<[1], [0], [0], [1], [0, 0, 1, 1], [], []>} : vector<128x256xbf16>, vector<256x64xbf16>, vector<128x64xf32> -> vector<128x64xf32>
    %8 = arith.addf %3, %7 : vector<128x64xf32>
    %c0_6 = arith.constant 0 : index
    %c0_7 = arith.constant 0 : index
    %9 = vector.load %arg5[%c0_6, %c0_7] : memref<128x64xf32, #tpu.memory_space<vmem>>, vector<128x64xf32>
    tpu.vector_store %arg5[%c0_6, %c0_7], %8 {strides = array<i32>} : memref<128x64xf32, #tpu.memory_space<vmem>>, vector<128x64xf32>,
    %c0_i32_8 = arith.constant 0 : i32
    %10 = arith.cmpi eq, %arg1, %c0_i32_8 : i32
    %11 = arith.extui %10 : i1 to i32
    %c0_i32_9 = arith.constant 0 : i32
    %12 = arith.cmpi ne, %11, %c0_i32_9 : i32
    scf.if %12 {
      %c0_10 = arith.constant 0 : index
      %c0_11 = arith.constant 0 : index
      %13 = vector.load %arg5[%c0_10, %c0_11] : memref<128x64xf32, #tpu.memory_space<vmem>>, vector<128x64xf32>
      %c0_12 = arith.constant 0 : index
      %c0_13 = arith.constant 0 : index
      %c0_14 = arith.constant 0 : index
      %14 = vector.load %arg4[%c0_12, %c0_13, %c0_14] : memref<1x128x64xf32, #tpu.memory_space<vmem>>, vector<1x128x64xf32>
      %15 = vector.shape_cast %14 : vector<1x128x64xf32> to vector<128x64xf32>
      %16 = vector.shape_cast %13 : vector<128x64xf32> to vector<1x128x64xf32>
      tpu.vector_store %arg4[%c0_12, %c0_13, %c0_14], %16 {strides = array<i32>} : memref<1x128x64xf32, #tpu.memory_space<vmem>>, vector<1x128x64xf32>,
    } else {
    }
    return
  }
  func.func @transform_0(%arg0: i32, %arg1: i32) -> (i32, i32) {
    %c1_i32 = arith.constant 1 : i32
    %0 = arith.muli %arg0, %c1_i32 : i32
    %1 = arith.addi %0, %arg1 : i32
    %c0_i32 = arith.constant 0 : i32
    %c0_i32_0 = arith.constant 0 : i32
    return %c0_i32, %1 : i32, i32
  }
  func.func @transform_1(%arg0: i32, %arg1: i32) -> (i32, i32) {
    %c1_i32 = arith.constant 1 : i32
    %0 = arith.muli %arg0, %c1_i32 : i32
    %1 = arith.addi %0, %arg1 : i32
    %c0_i32 = arith.constant 0 : i32
    %c0_i32_0 = arith.constant 0 : i32
    return %1, %c0_i32 : i32, i32
  }
  func.func @transform_2(%arg0: i32, %arg1: i32) -> (i32, i32, i32) {
    %c0_i32 = arith.constant 0 : i32
    %c0_i32_0 = arith.constant 0 : i32
    %c0_i32_1 = arith.constant 0 : i32
    return %arg0, %c0_i32, %c0_i32_0 : i32, i32, i32
  }
}

module attributes {stable_mosaic.version = 11 : i64} {
  func.func @decoder_kernel(%arg0: i32, %arg1: memref<1x128x64xf32, #tpu.memory_space<vmem>>, %arg2: memref<1x64xf32, #tpu.memory_space<vmem>>, %arg3: memref<1x64xf32, #tpu.memory_space<vmem>>, %arg4: memref<64x32xbf16, #tpu.memory_space<vmem>>, %arg5: memref<1x32xf32, #tpu.memory_space<vmem>>, %arg6: memref<1x32xf32, #tpu.memory_space<vmem>>, %arg7: memref<32x64xbf16, #tpu.memory_space<vmem>>, %arg8: memref<1x64xf32, #tpu.memory_space<vmem>>, %arg9: memref<1x64xf32, #tpu.memory_space<vmem>>, %arg10: memref<64x256xbf16, #tpu.memory_space<vmem>>, %arg11: memref<1x256xf32, #tpu.memory_space<vmem>>, %arg12: memref<128x256xbf16, #tpu.memory_space<vmem>>) attributes {dimension_semantics = [#tpu.dimension_semantics<parallel>], iteration_bounds = array<i64: 1>, scalar_prefetch = 0 : i64, scratch_operands = 0 : i64, tpu.core_type = #tpu.core_type<tc>, window_params = [{pipeline_mode = #tpu.pipeline_mode<synchronous>, transform_indices = @transform_0, window_bounds = array<i64: 1, 128, 64>}, {pipeline_mode = #tpu.pipeline_mode<synchronous>, transform_indices = @transform_1, window_bounds = array<i64: 1, 64>}, {pipeline_mode = #tpu.pipeline_mode<synchronous>, transform_indices = @transform_2, window_bounds = array<i64: 1, 64>}, {pipeline_mode = #tpu.pipeline_mode<synchronous>, transform_indices = @transform_3, window_bounds = array<i64: 64, 32>}, {pipeline_mode = #tpu.pipeline_mode<synchronous>, transform_indices = @transform_4, window_bounds = array<i64: 1, 32>}, {pipeline_mode = #tpu.pipeline_mode<synchronous>, transform_indices = @transform_5, window_bounds = array<i64: 1, 32>}, {pipeline_mode = #tpu.pipeline_mode<synchronous>, transform_indices = @transform_6, window_bounds = array<i64: 32, 64>}, {pipeline_mode = #tpu.pipeline_mode<synchronous>, transform_indices = @transform_7, window_bounds = array<i64: 1, 64>}, {pipeline_mode = #tpu.pipeline_mode<synchronous>, transform_indices = @transform_8, window_bounds = array<i64: 1, 64>}, {transform_indices = @transform_9, window_bounds = array<i64: 64, 256>}, {transform_indices = @transform_10, window_bounds = array<i64: 1, 256>}, {transform_indices = @transform_11, window_bounds = array<i64: 128, 256>}]} {
    %c0 = arith.constant 0 : index
    %c0_0 = arith.constant 0 : index
    %c0_1 = arith.constant 0 : index
    %0 = vector.load %arg1[%c0, %c0_0, %c0_1] : memref<1x128x64xf32, #tpu.memory_space<vmem>>, vector<1x128x64xf32>
    %1 = vector.shape_cast %0 : vector<1x128x64xf32> to vector<128x64xf32>
    %c0_2 = arith.constant 0 : index
    %c0_3 = arith.constant 0 : index
    %2 = vector.load %arg2[%c0_2, %c0_3] : memref<1x64xf32, #tpu.memory_space<vmem>>, vector<1x64xf32>
    %c0_4 = arith.constant 0 : index
    %c0_5 = arith.constant 0 : index
    %3 = vector.load %arg3[%c0_4, %c0_5] : memref<1x64xf32, #tpu.memory_space<vmem>>, vector<1x64xf32>
    %cst = arith.constant dense<0.000000e+00> : vector<64xf32>
    %4 = vector.multi_reduction <add>, %1, %cst [0] : vector<128x64xf32> to vector<64xf32>
    %5 = vector.shape_cast %4 : vector<64xf32> to vector<1x64xf32>
    %cst_6 = arith.constant 1.280000e+02 : f32
    %6 = vector.broadcast %cst_6 : f32 to vector<1x64xf32>
    %7 = arith.divf %5, %6 : vector<1x64xf32>
    %8 = vector.broadcast %7 : vector<1x64xf32> to vector<128x64xf32>
    %9 = arith.subf %1, %8 : vector<128x64xf32>
    %10 = arith.mulf %9, %9 : vector<128x64xf32>
    %cst_7 = arith.constant dense<0.000000e+00> : vector<64xf32>
    %11 = vector.multi_reduction <add>, %10, %cst_7 [0] : vector<128x64xf32> to vector<64xf32>
    %12 = vector.shape_cast %11 : vector<64xf32> to vector<1x64xf32>
    %cst_8 = arith.constant 1.280000e+02 : f32
    %13 = vector.broadcast %cst_8 : f32 to vector<1x64xf32>
    %14 = arith.divf %12, %13 : vector<1x64xf32>
    %15 = vector.broadcast %7 : vector<1x64xf32> to vector<128x64xf32>
    %16 = arith.subf %1, %15 : vector<128x64xf32>
    %cst_9 = arith.constant 9.99999974E-6 : f32
    %17 = vector.broadcast %cst_9 : f32 to vector<1x64xf32>
    %18 = arith.addf %14, %17 : vector<1x64xf32>
    %19 = math.rsqrt %18 : vector<1x64xf32>
    %20 = vector.broadcast %19 : vector<1x64xf32> to vector<128x64xf32>
    %21 = arith.mulf %16, %20 : vector<128x64xf32>
    %22 = vector.broadcast %2 : vector<1x64xf32> to vector<128x64xf32>
    %23 = arith.mulf %21, %22 : vector<128x64xf32>
    %24 = vector.broadcast %3 : vector<1x64xf32> to vector<128x64xf32>
    %25 = arith.addf %23, %24 : vector<128x64xf32>
    %cst_10 = arith.constant 0.000000e+00 : f32
    %26 = vector.broadcast %cst_10 : f32 to vector<128x64xf32>
    %27 = arith.maximumf %25, %26 : vector<128x64xf32>
    %c0_11 = arith.constant 0 : index
    %c0_12 = arith.constant 0 : index
    %28 = vector.load %arg4[%c0_11, %c0_12] : memref<64x32xbf16, #tpu.memory_space<vmem>>, vector<64x32xbf16>
    %c0_13 = arith.constant 0 : index
    %c0_14 = arith.constant 0 : index
    %29 = vector.load %arg5[%c0_13, %c0_14] : memref<1x32xf32, #tpu.memory_space<vmem>>, vector<1x32xf32>
    %c0_15 = arith.constant 0 : index
    %c0_16 = arith.constant 0 : index
    %30 = vector.load %arg6[%c0_15, %c0_16] : memref<1x32xf32, #tpu.memory_space<vmem>>, vector<1x32xf32>
    %31 = arith.truncf %27 : vector<128x64xf32> to vector<128x64xbf16>
    %cst_17 = arith.constant dense<0.000000e+00> : vector<128x32xf32>
    %32 = tpu.matmul %31, %28, %cst_17 {dimension_numbers = #tpu.dot_dimension_numbers<[1], [0], [0], [1], [0, 0, 1, 1], [], []>} : vector<128x64xbf16>, vector<64x32xbf16>, vector<128x32xf32> -> vector<128x32xf32>
    %cst_18 = arith.constant dense<0.000000e+00> : vector<32xf32>
    %33 = vector.multi_reduction <add>, %32, %cst_18 [0] : vector<128x32xf32> to vector<32xf32>
    %34 = vector.shape_cast %33 : vector<32xf32> to vector<1x32xf32>
    %cst_19 = arith.constant 1.280000e+02 : f32
    %35 = vector.broadcast %cst_19 : f32 to vector<1x32xf32>
    %36 = arith.divf %34, %35 : vector<1x32xf32>
    %37 = vector.broadcast %36 : vector<1x32xf32> to vector<128x32xf32>
    %38 = arith.subf %32, %37 : vector<128x32xf32>
    %39 = arith.mulf %38, %38 : vector<128x32xf32>
    %cst_20 = arith.constant dense<0.000000e+00> : vector<32xf32>
    %40 = vector.multi_reduction <add>, %39, %cst_20 [0] : vector<128x32xf32> to vector<32xf32>
    %41 = vector.shape_cast %40 : vector<32xf32> to vector<1x32xf32>
    %cst_21 = arith.constant 1.280000e+02 : f32
    %42 = vector.broadcast %cst_21 : f32 to vector<1x32xf32>
    %43 = arith.divf %41, %42 : vector<1x32xf32>
    %44 = vector.broadcast %36 : vector<1x32xf32> to vector<128x32xf32>
    %45 = arith.subf %32, %44 : vector<128x32xf32>
    %cst_22 = arith.constant 9.99999974E-6 : f32
    %46 = vector.broadcast %cst_22 : f32 to vector<1x32xf32>
    %47 = arith.addf %43, %46 : vector<1x32xf32>
    %48 = math.rsqrt %47 : vector<1x32xf32>
    %49 = vector.broadcast %48 : vector<1x32xf32> to vector<128x32xf32>
    %50 = arith.mulf %45, %49 : vector<128x32xf32>
    %51 = vector.broadcast %29 : vector<1x32xf32> to vector<128x32xf32>
    %52 = arith.mulf %50, %51 : vector<128x32xf32>
    %53 = vector.broadcast %30 : vector<1x32xf32> to vector<128x32xf32>
    %54 = arith.addf %52, %53 : vector<128x32xf32>
    %cst_23 = arith.constant 0.000000e+00 : f32
    %55 = vector.broadcast %cst_23 : f32 to vector<128x32xf32>
    %56 = arith.maximumf %54, %55 : vector<128x32xf32>
    %c0_24 = arith.constant 0 : index
    %c0_25 = arith.constant 0 : index
    %57 = vector.load %arg7[%c0_24, %c0_25] : memref<32x64xbf16, #tpu.memory_space<vmem>>, vector<32x64xbf16>
    %c0_26 = arith.constant 0 : index
    %c0_27 = arith.constant 0 : index
    %58 = vector.load %arg8[%c0_26, %c0_27] : memref<1x64xf32, #tpu.memory_space<vmem>>, vector<1x64xf32>
    %c0_28 = arith.constant 0 : index
    %c0_29 = arith.constant 0 : index
    %59 = vector.load %arg9[%c0_28, %c0_29] : memref<1x64xf32, #tpu.memory_space<vmem>>, vector<1x64xf32>
    %60 = arith.truncf %56 : vector<128x32xf32> to vector<128x32xbf16>
    %cst_30 = arith.constant dense<0.000000e+00> : vector<128x64xf32>
    %61 = tpu.matmul %60, %57, %cst_30 {dimension_numbers = #tpu.dot_dimension_numbers<[1], [0], [0], [1], [0, 0, 1, 1], [], []>} : vector<128x32xbf16>, vector<32x64xbf16>, vector<128x64xf32> -> vector<128x64xf32>
    %cst_31 = arith.constant dense<0.000000e+00> : vector<64xf32>
    %62 = vector.multi_reduction <add>, %61, %cst_31 [0] : vector<128x64xf32> to vector<64xf32>
    %63 = vector.shape_cast %62 : vector<64xf32> to vector<1x64xf32>
    %cst_32 = arith.constant 1.280000e+02 : f32
    %64 = vector.broadcast %cst_32 : f32 to vector<1x64xf32>
    %65 = arith.divf %63, %64 : vector<1x64xf32>
    %66 = vector.broadcast %65 : vector<1x64xf32> to vector<128x64xf32>
    %67 = arith.subf %61, %66 : vector<128x64xf32>
    %68 = arith.mulf %67, %67 : vector<128x64xf32>
    %cst_33 = arith.constant dense<0.000000e+00> : vector<64xf32>
    %69 = vector.multi_reduction <add>, %68, %cst_33 [0] : vector<128x64xf32> to vector<64xf32>
    %70 = vector.shape_cast %69 : vector<64xf32> to vector<1x64xf32>
    %cst_34 = arith.constant 1.280000e+02 : f32
    %71 = vector.broadcast %cst_34 : f32 to vector<1x64xf32>
    %72 = arith.divf %70, %71 : vector<1x64xf32>
    %73 = vector.broadcast %65 : vector<1x64xf32> to vector<128x64xf32>
    %74 = arith.subf %61, %73 : vector<128x64xf32>
    %cst_35 = arith.constant 9.99999974E-6 : f32
    %75 = vector.broadcast %cst_35 : f32 to vector<1x64xf32>
    %76 = arith.addf %72, %75 : vector<1x64xf32>
    %77 = math.rsqrt %76 : vector<1x64xf32>
    %78 = vector.broadcast %77 : vector<1x64xf32> to vector<128x64xf32>
    %79 = arith.mulf %74, %78 : vector<128x64xf32>
    %80 = vector.broadcast %58 : vector<1x64xf32> to vector<128x64xf32>
    %81 = arith.mulf %79, %80 : vector<128x64xf32>
    %82 = vector.broadcast %59 : vector<1x64xf32> to vector<128x64xf32>
    %83 = arith.addf %81, %82 : vector<128x64xf32>
    %cst_36 = arith.constant 0.000000e+00 : f32
    %84 = vector.broadcast %cst_36 : f32 to vector<128x64xf32>
    %85 = arith.maximumf %83, %84 : vector<128x64xf32>
    %86 = arith.truncf %85 : vector<128x64xf32> to vector<128x64xbf16>
    %c0_37 = arith.constant 0 : index
    %c0_38 = arith.constant 0 : index
    %87 = vector.load %arg10[%c0_37, %c0_38] : memref<64x256xbf16, #tpu.memory_space<vmem>>, vector<64x256xbf16>
    %cst_39 = arith.constant dense<0.000000e+00> : vector<128x256xf32>
    %88 = tpu.matmul %86, %87, %cst_39 {dimension_numbers = #tpu.dot_dimension_numbers<[1], [0], [0], [1], [0, 0, 1, 1], [], []>} : vector<128x64xbf16>, vector<64x256xbf16>, vector<128x256xf32> -> vector<128x256xf32>
    %c0_40 = arith.constant 0 : index
    %c0_41 = arith.constant 0 : index
    %89 = vector.load %arg11[%c0_40, %c0_41] : memref<1x256xf32, #tpu.memory_space<vmem>>, vector<1x256xf32>
    %90 = vector.broadcast %89 : vector<1x256xf32> to vector<128x256xf32>
    %91 = arith.addf %88, %90 : vector<128x256xf32>
    %92 = math.exp %91 : vector<128x256xf32>
    %93 = arith.truncf %92 : vector<128x256xf32> to vector<128x256xbf16>
    %c0_42 = arith.constant 0 : index
    %c0_43 = arith.constant 0 : index
    %94 = vector.load %arg12[%c0_42, %c0_43] : memref<128x256xbf16, #tpu.memory_space<vmem>>, vector<128x256xbf16>
    tpu.vector_store %arg12[%c0_42, %c0_43], %93 {strides = array<i32>} : memref<128x256xbf16, #tpu.memory_space<vmem>>, vector<128x256xbf16>,
    return
  }
  func.func @transform_0(%arg0: i32) -> (i32, i32, i32) {
    %c0_i32 = arith.constant 0 : i32
    %c0_i32_0 = arith.constant 0 : i32
    %c0_i32_1 = arith.constant 0 : i32
    %c0_i32_2 = arith.constant 0 : i32
    return %c0_i32, %c0_i32_0, %c0_i32_1 : i32, i32, i32
  }
  func.func @transform_1(%arg0: i32) -> (i32, i32) {
    %c0_i32 = arith.constant 0 : i32
    %c0_i32_0 = arith.constant 0 : i32
    %c0_i32_1 = arith.constant 0 : i32
    return %c0_i32, %c0_i32_0 : i32, i32
  }
  func.func @transform_2(%arg0: i32) -> (i32, i32) {
    %c0_i32 = arith.constant 0 : i32
    %c0_i32_0 = arith.constant 0 : i32
    %c0_i32_1 = arith.constant 0 : i32
    return %c0_i32, %c0_i32_0 : i32, i32
  }
  func.func @transform_3(%arg0: i32) -> (i32, i32) {
    %c0_i32 = arith.constant 0 : i32
    %c0_i32_0 = arith.constant 0 : i32
    %c0_i32_1 = arith.constant 0 : i32
    return %c0_i32, %c0_i32_0 : i32, i32
  }
  func.func @transform_4(%arg0: i32) -> (i32, i32) {
    %c0_i32 = arith.constant 0 : i32
    %c0_i32_0 = arith.constant 0 : i32
    %c0_i32_1 = arith.constant 0 : i32
    return %c0_i32, %c0_i32_0 : i32, i32
  }
  func.func @transform_5(%arg0: i32) -> (i32, i32) {
    %c0_i32 = arith.constant 0 : i32
    %c0_i32_0 = arith.constant 0 : i32
    %c0_i32_1 = arith.constant 0 : i32
    return %c0_i32, %c0_i32_0 : i32, i32
  }
  func.func @transform_6(%arg0: i32) -> (i32, i32) {
    %c0_i32 = arith.constant 0 : i32
    %c0_i32_0 = arith.constant 0 : i32
    %c0_i32_1 = arith.constant 0 : i32
    return %c0_i32, %c0_i32_0 : i32, i32
  }
  func.func @transform_7(%arg0: i32) -> (i32, i32) {
    %c0_i32 = arith.constant 0 : i32
    %c0_i32_0 = arith.constant 0 : i32
    %c0_i32_1 = arith.constant 0 : i32
    return %c0_i32, %c0_i32_0 : i32, i32
  }
  func.func @transform_8(%arg0: i32) -> (i32, i32) {
    %c0_i32 = arith.constant 0 : i32
    %c0_i32_0 = arith.constant 0 : i32
    %c0_i32_1 = arith.constant 0 : i32
    return %c0_i32, %c0_i32_0 : i32, i32
  }
  func.func @transform_9(%arg0: i32) -> (i32, i32) {
    %c0_i32 = arith.constant 0 : i32
    %c0_i32_0 = arith.constant 0 : i32
    return %c0_i32, %arg0 : i32, i32
  }
  func.func @transform_10(%arg0: i32) -> (i32, i32) {
    %c0_i32 = arith.constant 0 : i32
    %c0_i32_0 = arith.constant 0 : i32
    return %c0_i32, %arg0 : i32, i32
  }
  func.func @transform_11(%arg0: i32) -> (i32, i32) {
    %c0_i32 = arith.constant 0 : i32
    %c0_i32_0 = arith.constant 0 : i32
    return %c0_i32, %arg0 : i32, i32
  }
}

</mosaic_0001>

<llo_original>
// kernel: deep_count_autoencoder.2
$region0: #{deep_count_autoencoder.2}
  #allocation0 [shape = 'u32[]', space=smem, size = 0x4, offset = 0x4, fixed_abs, tag = 'smem constant byte address 0x4 - core index']
  #allocation1 [shape = 'u32[72,128]{1,0:T(1,128)}', space=vmem, size = 0x9000, scoped, tag = 'internal scratch']
  #allocation2 [shape = 'f32[128,64]{1,0:T(8,128)}', space=vmem, size = 0x10000, scoped, tag = 'scratch operand']
  %s0 = inlined_call_operand.hbm [shape: f32[128,256], index: 0, kind: input, shape index: {}]
  %s1 = inlined_call_operand.vmem [shape: bf16[256,64], index: 1, kind: input, shape index: {}]
  %s2 = inlined_call_operand.vmem [shape: f32[1,128,64], index: 2, kind: output, shape index: {}]
  %s3 = sld [smem:[#allocation0]]
  $region30: #{deep_count_autoencoder.2} parent=0
    _
  %s5 = ssub.s32 1, %s3
  %s6 = scalar_select 0, %s5, %s3
  $region1: #{deep_count_autoencoder.2} parent=0
    #allocation3 [shape = 'u8[131072]{0}', space=vmem, size = 0x20000, scoped, tag = 'input window, operand 0, single buffered']
    #allocation4 [shape = 's32[1]{0}', space=sflag, size = 0x4, scoped, tag = 'scoped memory for deep_count_autoencoder.2']
    %7 = vsyncpa [#allocation4], 0
    // Predicated region
    $region2: #{deep_count_autoencoder.2} parent=1 // pred_check
      _
    $region3: #{deep_count_autoencoder.2} parent=1 // pred_check_branch
      %9 = sbr.rel (0) target = $region5
    $region4: #{deep_count_autoencoder.2} parent=1 // pred_region
      %s10 = sadd.s32 0, 0
      %s11 = smul.u32 2, %s10
      %13 = vsyncadd [#allocation4], 0
      %s14 = smul.addr %s11, 8
      %s15 = scalar_lea.hbm %s0, %s14
      %s16 = sshll.u32 %s15, 4
      %s17 = int_to_ptr.hbm [resolvable:$true] %s16
      %s18 = sshll.u32 [#allocation3], 4
      %s19 = int_to_ptr.vmem [resolvable:$true] %s18
      %24 = dma.hbm_to_vmem [thread:$0]  %s17, 4096, %s19, [#allocation4], 256, 256, 16
    $region5: #{deep_count_autoencoder.2} parent=1 // pred_fallthru
      _
    // Predicated region
    $region6: #{deep_count_autoencoder.2} parent=1 // pred_check
      _
    $region7: #{deep_count_autoencoder.2} parent=1 // pred_check_branch
      %26 = sbr.rel (0) target = $region9
    $region8: #{deep_count_autoencoder.2} parent=1 // pred_region
      %s27 = sadd.s32 0, 0
      %s28 = smul.u32 32, %s27
      %p29 = scmp.lt.s32.totalorder %s28, 31
      %s30 = scalar_select %p29, %s28, 31
      %s31 = smul.addr %s30, 4
      %s32 = scalar_lea.vmem %s1, %s31
      %s33 = sadd.s32 0, 0
      %s34 = smul.u32 32, %s33
    $region9: #{deep_count_autoencoder.2} parent=1 // pred_fallthru
      _
    // Predicated region
    $region10: #{deep_count_autoencoder.2} parent=1 // pred_check
      _
    $region11: #{deep_count_autoencoder.2} parent=1 // pred_check_branch
      %36 = sbr.rel (0) target = $region13
    $region12: #{deep_count_autoencoder.2} parent=1 // pred_region
      %38 = dma.done [#allocation4], 4096
    $region13: #{deep_count_autoencoder.2} parent=1 // pred_fallthru
      _
    %s39 = sadd.s32 0, 0
    %s40 = smul.u32 32, %s39
    %p41 = scmp.lt.s32.totalorder %s40, 31
    %s42 = scalar_select %p41, %s40, 31
    %s43 = smul.addr %s42, 4
    %s44 = scalar_lea.vmem %s1, %s43
    %s45 = sadd.s32 0, 0
    %s46 = smul.u32 2, %s45
    %s47 = sadd.s32 0, 0
    %s48 = smul.u32 32, %s47
    %p49 = scmp.lt.s32.totalorder %s48, 31
    %s50 = scalar_select %p49, %s48, 31
    %s51 = smul.addr %s50, 4
    %s52 = scalar_lea.vmem %s1, %s51
    %s53 = sadd.s32 0, 0
    %s54 = smul.u32 32, %s53
    %p55 = scmp.eq.s32.totalorder 0, 0
    // Predicated region
    $region14: #{deep_count_autoencoder.2} parent=1 // pred_check
      %p56 = pneg %p55
    $region15: #{deep_count_autoencoder.2} parent=1 // pred_check_branch
      %58 = sbr.rel (%p56) target = $region17
    $region16: #{deep_count_autoencoder.2} parent=1 // pred_region
      %vm59 = vcmask 523264
      %60 = vst.msk [vmem:[#allocation2] sm:$0xff] %vm59, 0.0
      %61 = vst.msk [vmem:[#allocation2 + $0x8] sm:$0xff] %vm59, 0.0
      %62 = vst.msk [vmem:[#allocation2 + $0x10] sm:$0xff] %vm59, 0.0
      %63 = vst.msk [vmem:[#allocation2 + $0x18] sm:$0xff] %vm59, 0.0
      %64 = vst.msk [vmem:[#allocation2 + $0x20] sm:$0xff] %vm59, 0.0
      %65 = vst.msk [vmem:[#allocation2 + $0x28] sm:$0xff] %vm59, 0.0
      %66 = vst.msk [vmem:[#allocation2 + $0x30] sm:$0xff] %vm59, 0.0
      %67 = vst.msk [vmem:[#allocation2 + $0x38] sm:$0xff] %vm59, 0.0
      %68 = vst.msk [vmem:[#allocation2 + $0x40] sm:$0xff] %vm59, 0.0
      %69 = vst.msk [vmem:[#allocation2 + $0x48] sm:$0xff] %vm59, 0.0
      %70 = vst.msk [vmem:[#allocation2 + $0x50] sm:$0xff] %vm59, 0.0
      %71 = vst.msk [vmem:[#allocation2 + $0x58] sm:$0xff] %vm59, 0.0
      %72 = vst.msk [vmem:[#allocation2 + $0x60] sm:$0xff] %vm59, 0.0
      %73 = vst.msk [vmem:[#allocation2 + $0x68] sm:$0xff] %vm59, 0.0
      %74 = vst.msk [vmem:[#allocation2 + $0x70] sm:$0xff] %vm59, 0.0
      %75 = vst.msk [vmem:[#allocation2 + $0x78] sm:$0xff] %vm59, 0.0
    $region17: #{deep_count_autoencoder.2} parent=1 // pred_fallthru
      _
    %v76 = vld [vmem:[#allocation2] sm:$0xff]
    %v77 = vld [vmem:[#allocation2 + $0x8] sm:$0xff]
    %v78 = vld [vmem:[#allocation2 + $0x10] sm:$0xff]
    %v79 = vld [vmem:[#allocation2 + $0x18] sm:$0xff]
    %v80 = vld [vmem:[#allocation2 + $0x20] sm:$0xff]
    %v81 = vld [vmem:[#allocation2 + $0x28] sm:$0xff]
    %v82 = vld [vmem:[#allocation2 + $0x30] sm:$0xff]
    %v83 = vld [vmem:[#allocation2 + $0x38] sm:$0xff]
    %v84 = vld [vmem:[#allocation2 + $0x40] sm:$0xff]
    %v85 = vld [vmem:[#allocation2 + $0x48] sm:$0xff]
    %v86 = vld [vmem:[#allocation2 + $0x50] sm:$0xff]
    %v87 = vld [vmem:[#allocation2 + $0x58] sm:$0xff]
    %v88 = vld [vmem:[#allocation2 + $0x60] sm:$0xff]
    %v89 = vld [vmem:[#allocation2 + $0x68] sm:$0xff]
    %v90 = vld [vmem:[#allocation2 + $0x70] sm:$0xff]
    %v91 = vld [vmem:[#allocation2 + $0x78] sm:$0xff]
    %v92 = vld [vmem:[#allocation3] sm:$0xff]
    %v93 = vld [vmem:[#allocation3 + $0x8] sm:$0xff]
    %v94 = vld [vmem:[#allocation3 + $0x10] sm:$0xff]
    %v95 = vld [vmem:[#allocation3 + $0x18] sm:$0xff]
    %v96 = vld [vmem:[#allocation3 + $0x20] sm:$0xff]
    %v97 = vld [vmem:[#allocation3 + $0x28] sm:$0xff]
    %v98 = vld [vmem:[#allocation3 + $0x30] sm:$0xff]
    %v99 = vld [vmem:[#allocation3 + $0x38] sm:$0xff]
    %v100 = vld [vmem:[#allocation3 + $0x40] sm:$0xff]
    %v101 = vld [vmem:[#allocation3 + $0x48] sm:$0xff]
    %v102 = vld [vmem:[#allocation3 + $0x50] sm:$0xff]
    %v103 = vld [vmem:[#allocation3 + $0x58] sm:$0xff]
    %v104 = vld [vmem:[#allocation3 + $0x60] sm:$0xff]
    %v105 = vld [vmem:[#allocation3 + $0x68] sm:$0xff]
    %v106 = vld [vmem:[#allocation3 + $0x70] sm:$0xff]
    %v107 = vld [vmem:[#allocation3 + $0x78] sm:$0xff]
    %v108 = vld [vmem:[#allocation3 + $0x80] sm:$0xff]
    %v109 = vld [vmem:[#allocation3 + $0x88] sm:$0xff]
    %v110 = vld [vmem:[#allocation3 + $0x90] sm:$0xff]
    %v111 = vld [vmem:[#allocation3 + $0x98] sm:$0xff]
    %v112 = vld [vmem:[#allocation3 + $0xa0] sm:$0xff]
    %v113 = vld [vmem:[#allocation3 + $0xa8] sm:$0xff]
    %v114 = vld [vmem:[#allocation3 + $0xb0] sm:$0xff]
    %v115 = vld [vmem:[#allocation3 + $0xb8] sm:$0xff]
    %v116 = vld [vmem:[#allocation3 + $0xc0] sm:$0xff]
    %v117 = vld [vmem:[#allocation3 + $0xc8] sm:$0xff]
    %v118 = vld [vmem:[#allocation3 + $0xd0] sm:$0xff]
    %v119 = vld [vmem:[#allocation3 + $0xd8] sm:$0xff]
    %v120 = vld [vmem:[#allocation3 + $0xe0] sm:$0xff]
    %v121 = vld [vmem:[#allocation3 + $0xe8] sm:$0xff]
    %v122 = vld [vmem:[#allocation3 + $0xf0] sm:$0xff]
    %v123 = vld [vmem:[#allocation3 + $0xf8] sm:$0xff]
    %v124 = vpack.c.bf16 %v94, %v92
    %v125 = vpack.c.bf16 %v95, %v93
    %v126 = vpack.c.bf16 %v98, %v96
    %v127 = vpack.c.bf16 %v99, %v97
    %v128 = vpack.c.bf16 %v102, %v100
    %v129 = vpack.c.bf16 %v103, %v101
    %v130 = vpack.c.bf16 %v106, %v104
    %v131 = vpack.c.bf16 %v107, %v105
    %v132 = vpack.c.bf16 %v110, %v108
    %v133 = vpack.c.bf16 %v111, %v109
    %v134 = vpack.c.bf16 %v114, %v112
    %v135 = vpack.c.bf16 %v115, %v113
    %v136 = vpack.c.bf16 %v118, %v116
    %v137 = vpack.c.bf16 %v119, %v117
    %v138 = vpack.c.bf16 %v122, %v120
    %v139 = vpack.c.bf16 %v123, %v121
    %v140 = vld [vmem:[%s52] sm:$0xf]
    %v141 = vld [vmem:[%s52 + $0x4] sm:$0xf]
    %v142 = vld [vmem:[%s52 + $0x8] sm:$0xf]
    %v143 = vld [vmem:[%s52 + $0xc] sm:$0xf]
    %v144 = vld [vmem:[%s52 + $0x10] sm:$0xf]
    %v145 = vld [vmem:[%s52 + $0x14] sm:$0xf]
    %v146 = vld [vmem:[%s52 + $0x18] sm:$0xf]
    %v147 = vld [vmem:[%s52 + $0x1c] sm:$0xf]
    %v148 = vld [vmem:[%s52 + $0x20] sm:$0xf]
    %v149 = vld [vmem:[%s52 + $0x24] sm:$0xf]
    %v150 = vld [vmem:[%s52 + $0x28] sm:$0xf]
    %v151 = vld [vmem:[%s52 + $0x2c] sm:$0xf]
    %v152 = vld [vmem:[%s52 + $0x30] sm:$0xf]
    %v153 = vld [vmem:[%s52 + $0x34] sm:$0xf]
    %v154 = vld [vmem:[%s52 + $0x38] sm:$0xf]
    %v155 = vld [vmem:[%s52 + $0x3c] sm:$0xf]
    %v156 = vld [vmem:[%s52 + $0x40] sm:$0xf]
    %v157 = vld [vmem:[%s52 + $0x44] sm:$0xf]
    %v158 = vld [vmem:[%s52 + $0x48] sm:$0xf]
    %v159 = vld [vmem:[%s52 + $0x4c] sm:$0xf]
    %v160 = vld [vmem:[%s52 + $0x50] sm:$0xf]
    %v161 = vld [vmem:[%s52 + $0x54] sm:$0xf]
    %v162 = vld [vmem:[%s52 + $0x58] sm:$0xf]
    %v163 = vld [vmem:[%s52 + $0x5c] sm:$0xf]
    %v164 = vld [vmem:[%s52 + $0x60] sm:$0xf]
    %v165 = vld [vmem:[%s52 + $0x64] sm:$0xf]
    %v166 = vld [vmem:[%s52 + $0x68] sm:$0xf]
    %v167 = vld [vmem:[%s52 + $0x6c] sm:$0xf]
    %v168 = vld [vmem:[%s52 + $0x70] sm:$0xf]
    %v169 = vld [vmem:[%s52 + $0x74] sm:$0xf]
    %v170 = vld [vmem:[%s52 + $0x78] sm:$0xf]
    %v171 = vld [vmem:[%s52 + $0x7c] sm:$0xf]
    %v204 = vunpack.c.l.b16 %v140
    %v205 = vunpack.c.l.b16 %v141
    %v206 = vunpack.c.l.b16 %v142
    %v207 = vunpack.c.l.b16 %v143
    %v208 = vunpack.c.l.b16 %v144
    %v209 = vunpack.c.l.b16 %v145
    %v210 = vunpack.c.l.b16 %v146
    %v211 = vunpack.c.l.b16 %v147
    %v212 = vunpack.c.l.b16 %v148
    %v213 = vunpack.c.l.b16 %v149
    %v214 = vunpack.c.l.b16 %v150
    %v215 = vunpack.c.l.b16 %v151
    %v216 = vunpack.c.l.b16 %v152
    %v217 = vunpack.c.l.b16 %v153
    %v218 = vunpack.c.l.b16 %v154
    %v219 = vunpack.c.l.b16 %v155
    %v220 = vunpack.c.l.b16 %v156
    %v221 = vunpack.c.l.b16 %v157
    %v222 = vunpack.c.l.b16 %v158
    %v223 = vunpack.c.l.b16 %v159
    %v224 = vunpack.c.l.b16 %v160
    %v225 = vunpack.c.l.b16 %v161
    %v226 = vunpack.c.l.b16 %v162
    %v227 = vunpack.c.l.b16 %v163
    %v228 = vunpack.c.l.b16 %v164
    %v229 = vunpack.c.l.b16 %v165
    %v230 = vunpack.c.l.b16 %v166
    %v231 = vunpack.c.l.b16 %v167
    %v232 = vunpack.c.l.b16 %v168
    %v233 = vunpack.c.l.b16 %v169
    %v234 = vunpack.c.l.b16 %v170
    %v235 = vunpack.c.l.b16 %v171
    %v236 = vpack.c.b16 %v205, %v204
    %v237 = vpack.c.b16 %v207, %v206
    %v238 = vpack.c.b16 %v209, %v208
    %v239 = vpack.c.b16 %v211, %v210
    %v240 = vpack.c.b16 %v213, %v212
    %v241 = vpack.c.b16 %v215, %v214
    %v242 = vpack.c.b16 %v217, %v216
    %v243 = vpack.c.b16 %v219, %v218
    %v244 = vpack.c.b16 %v221, %v220
    %v245 = vpack.c.b16 %v223, %v222
    %v246 = vpack.c.b16 %v225, %v224
    %v247 = vpack.c.b16 %v227, %v226
    %v248 = vpack.c.b16 %v229, %v228
    %v249 = vpack.c.b16 %v231, %v230
    %v250 = vpack.c.b16 %v233, %v232
    %v251 = vpack.c.b16 %v235, %v234
    %268 = vmatpush.bf16.msra.mxu0 %v243
    %269 = vmatpush.bf16.msra.mxu0 %v242
    %270 = vmatpush.bf16.msra.mxu0 %v241
    %271 = vmatpush.bf16.msra.mxu0 %v240
    %272 = vmatpush.bf16.msra.mxu0 %v239
    %273 = vmatpush.bf16.msra.mxu0 %v238
    %274 = vmatpush.bf16.msra.mxu0 %v237
    %275 = vmatpush.bf16.msra.mxu0 %v236
    %276 = vmatmul.bf16.gmra.mxu0 %v124
    %v277 = vpop.f32.mrf.mxu0
    %v278 = vadd.f32 0.0, %v277
    %v279 = vpop.f32.mrf.mxu0
    %v280 = vadd.f32 0.0, %v279
    %281 = vmatmul.bf16.gmra.mxu0 %v126
    %v282 = vpop.f32.mrf.mxu0
    %v283 = vadd.f32 0.0, %v282
    %v284 = vpop.f32.mrf.mxu0
    %v285 = vadd.f32 0.0, %v284
    %286 = vmatmul.bf16.gmra.mxu0 %v128
    %v287 = vpop.f32.mrf.mxu0
    %v288 = vadd.f32 0.0, %v287
    %v289 = vpop.f32.mrf.mxu0
    %v290 = vadd.f32 0.0, %v289
    %291 = vmatmul.bf16.gmra.mxu0 %v130
    %v292 = vpop.f32.mrf.mxu0
    %v293 = vadd.f32 0.0, %v292
    %v294 = vpop.f32.mrf.mxu0
    %v295 = vadd.f32 0.0, %v294
    %296 = vmatmul.bf16.gmra.mxu0 %v132
    %v297 = vpop.f32.mrf.mxu0
    %v298 = vadd.f32 0.0, %v297
    %v299 = vpop.f32.mrf.mxu0
    %v300 = vadd.f32 0.0, %v299
    %301 = vmatmul.bf16.gmra.mxu0 %v134
    %v302 = vpop.f32.mrf.mxu0
    %v303 = vadd.f32 0.0, %v302
    %v304 = vpop.f32.mrf.mxu0
    %v305 = vadd.f32 0.0, %v304
    %306 = vmatmul.bf16.gmra.mxu0 %v136
    %v307 = vpop.f32.mrf.mxu0
    %v308 = vadd.f32 0.0, %v307
    %v309 = vpop.f32.mrf.mxu0
    %v310 = vadd.f32 0.0, %v309
    %311 = vmatmul.bf16.gmra.mxu0 %v138
    %v312 = vpop.f32.mrf.mxu0
    %v313 = vadd.f32 0.0, %v312
    %v314 = vpop.f32.mrf.mxu0
    %v315 = vadd.f32 0.0, %v314
    %316 = vdwg.mxu0
    %317 = vmatpush.bf16.msra.mxu0 %v251
    %318 = vmatpush.bf16.msra.mxu0 %v250
    %319 = vmatpush.bf16.msra.mxu0 %v249
    %320 = vmatpush.bf16.msra.mxu0 %v248
    %321 = vmatpush.bf16.msra.mxu0 %v247
    %322 = vmatpush.bf16.msra.mxu0 %v246
    %323 = vmatpush.bf16.msra.mxu0 %v245
    %324 = vmatpush.bf16.msra.mxu0 %v244
    %325 = vmatmul.bf16.gmra.mxu0 %v125
    %v326 = vpop.f32.mrf.mxu0
    %v327 = vadd.f32 %v278, %v326
    %v328 = vpop.f32.mrf.mxu0
    %v329 = vadd.f32 %v280, %v328
    %330 = vmatmul.bf16.gmra.mxu0 %v127
    %v331 = vpop.f32.mrf.mxu0
    %v332 = vadd.f32 %v283, %v331
    %v333 = vpop.f32.mrf.mxu0
    %v334 = vadd.f32 %v285, %v333
    %335 = vmatmul.bf16.gmra.mxu0 %v129
    %v336 = vpop.f32.mrf.mxu0
    %v337 = vadd.f32 %v288, %v336
    %v338 = vpop.f32.mrf.mxu0
    %v339 = vadd.f32 %v290, %v338
    %340 = vmatmul.bf16.gmra.mxu0 %v131
    %v341 = vpop.f32.mrf.mxu0
    %v342 = vadd.f32 %v293, %v341
    %v343 = vpop.f32.mrf.mxu0
    %v344 = vadd.f32 %v295, %v343
    %345 = vmatmul.bf16.gmra.mxu0 %v133
    %v346 = vpop.f32.mrf.mxu0
    %v347 = vadd.f32 %v298, %v346
    %v348 = vpop.f32.mrf.mxu0
    %v349 = vadd.f32 %v300, %v348
    %350 = vmatmul.bf16.gmra.mxu0 %v135
    %v351 = vpop.f32.mrf.mxu0
    %v352 = vadd.f32 %v303, %v351
    %v353 = vpop.f32.mrf.mxu0
    %v354 = vadd.f32 %v305, %v353
    %355 = vmatmul.bf16.gmra.mxu0 %v137
    %v356 = vpop.f32.mrf.mxu0
    %v357 = vadd.f32 %v308, %v356
    %v358 = vpop.f32.mrf.mxu0
    %v359 = vadd.f32 %v310, %v358
    %360 = vmatmul.bf16.gmra.mxu0 %v139
    %v361 = vpop.f32.mrf.mxu0
    %v362 = vadd.f32 %v313, %v361
    %v363 = vpop.f32.mrf.mxu0
    %v364 = vadd.f32 %v315, %v363
    %365 = vdwg.mxu0
    %v366 = vadd.f32 %v76, %v327
    %v367 = vadd.f32 %v77, %v329
    %v368 = vadd.f32 %v78, %v332
    %v369 = vadd.f32 %v79, %v334
    %v370 = vadd.f32 %v80, %v337
    %v371 = vadd.f32 %v81, %v339
    %v372 = vadd.f32 %v82, %v342
    %v373 = vadd.f32 %v83, %v344
    %v374 = vadd.f32 %v84, %v347
    %v375 = vadd.f32 %v85, %v349
    %v376 = vadd.f32 %v86, %v352
    %v377 = vadd.f32 %v87, %v354
    %v378 = vadd.f32 %v88, %v357
    %v379 = vadd.f32 %v89, %v359
    %v380 = vadd.f32 %v90, %v362
    %v381 = vadd.f32 %v91, %v364
    %vm382 = vcmask 523264
    %383 = vst.msk [vmem:[#allocation2] sm:$0xff] %vm382, %v366
    %384 = vst.msk [vmem:[#allocation2 + $0x8] sm:$0xff] %vm382, %v367
    %385 = vst.msk [vmem:[#allocation2 + $0x10] sm:$0xff] %vm382, %v368
    %386 = vst.msk [vmem:[#allocation2 + $0x18] sm:$0xff] %vm382, %v369
    %387 = vst.msk [vmem:[#allocation2 + $0x20] sm:$0xff] %vm382, %v370
    %388 = vst.msk [vmem:[#allocation2 + $0x28] sm:$0xff] %vm382, %v371
    %389 = vst.msk [vmem:[#allocation2 + $0x30] sm:$0xff] %vm382, %v372
    %390 = vst.msk [vmem:[#allocation2 + $0x38] sm:$0xff] %vm382, %v373
    %391 = vst.msk [vmem:[#allocation2 + $0x40] sm:$0xff] %vm382, %v374
    %392 = vst.msk [vmem:[#allocation2 + $0x48] sm:$0xff] %vm382, %v375
    %393 = vst.msk [vmem:[#allocation2 + $0x50] sm:$0xff] %vm382, %v376
    %394 = vst.msk [vmem:[#allocation2 + $0x58] sm:$0xff] %vm382, %v377
    %395 = vst.msk [vmem:[#allocation2 + $0x60] sm:$0xff] %vm382, %v378
    %396 = vst.msk [vmem:[#allocation2 + $0x68] sm:$0xff] %vm382, %v379
    %397 = vst.msk [vmem:[#allocation2 + $0x70] sm:$0xff] %vm382, %v380
    %398 = vst.msk [vmem:[#allocation2 + $0x78] sm:$0xff] %vm382, %v381
    // Predicated region
    $region18: #{deep_count_autoencoder.2} parent=1 // pred_check
      %p399 = pneg %p55
    $region19: #{deep_count_autoencoder.2} parent=1 // pred_check_branch
      %401 = sbr.rel (%p399) target = $region21
    $region20: #{deep_count_autoencoder.2} parent=1 // pred_region
      %v402 = vld [vmem:[#allocation2] sm:$0xff]
      %v403 = vld [vmem:[#allocation2 + $0x8] sm:$0xff]
      %v404 = vld [vmem:[#allocation2 + $0x10] sm:$0xff]
      %v405 = vld [vmem:[#allocation2 + $0x18] sm:$0xff]
      %v406 = vld [vmem:[#allocation2 + $0x20] sm:$0xff]
      %v407 = vld [vmem:[#allocation2 + $0x28] sm:$0xff]
      %v408 = vld [vmem:[#allocation2 + $0x30] sm:$0xff]
      %v409 = vld [vmem:[#allocation2 + $0x38] sm:$0xff]
      %v410 = vld [vmem:[#allocation2 + $0x40] sm:$0xff]
      %v411 = vld [vmem:[#allocation2 + $0x48] sm:$0xff]
      %v412 = vld [vmem:[#allocation2 + $0x50] sm:$0xff]
      %v413 = vld [vmem:[#allocation2 + $0x58] sm:$0xff]
      %v414 = vld [vmem:[#allocation2 + $0x60] sm:$0xff]
      %v415 = vld [vmem:[#allocation2 + $0x68] sm:$0xff]
      %v416 = vld [vmem:[#allocation2 + $0x70] sm:$0xff]
      %v417 = vld [vmem:[#allocation2 + $0x78] sm:$0xff]
      %418 = vst.msk [vmem:[%s2] sm:$0xff] %vm382, %v402
      %419 = vst.msk [vmem:[%s2 + $0x8] sm:$0xff] %vm382, %v403
      %420 = vst.msk [vmem:[%s2 + $0x10] sm:$0xff] %vm382, %v404
      %421 = vst.msk [vmem:[%s2 + $0x18] sm:$0xff] %vm382, %v405
      %422 = vst.msk [vmem:[%s2 + $0x20] sm:$0xff] %vm382, %v406
      %423 = vst.msk [vmem:[%s2 + $0x28] sm:$0xff] %vm382, %v407
      %424 = vst.msk [vmem:[%s2 + $0x30] sm:$0xff] %vm382, %v408
      %425 = vst.msk [vmem:[%s2 + $0x38] sm:$0xff] %vm382, %v409
      %426 = vst.msk [vmem:[%s2 + $0x40] sm:$0xff] %vm382, %v410
      %427 = vst.msk [vmem:[%s2 + $0x48] sm:$0xff] %vm382, %v411
      %428 = vst.msk [vmem:[%s2 + $0x50] sm:$0xff] %vm382, %v412
      %429 = vst.msk [vmem:[%s2 + $0x58] sm:$0xff] %vm382, %v413
      %430 = vst.msk [vmem:[%s2 + $0x60] sm:$0xff] %vm382, %v414
      %431 = vst.msk [vmem:[%s2 + $0x68] sm:$0xff] %vm382, %v415
      %432 = vst.msk [vmem:[%s2 + $0x70] sm:$0xff] %vm382, %v416
      %433 = vst.msk [vmem:[%s2 + $0x78] sm:$0xff] %vm382, %v417
    $region21: #{deep_count_autoencoder.2} parent=1 // pred_fallthru
      _
    // Predicated region
    $region22: #{deep_count_autoencoder.2} parent=1 // pred_check
      _
    $region23: #{deep_count_autoencoder.2} parent=1 // pred_check_branch
      %435 = sbr.rel (0) target = $region25
    $region24: #{deep_count_autoencoder.2} parent=1 // pred_region
      _
    $region25: #{deep_count_autoencoder.2} parent=1 // pred_fallthru
      _
    // Predicated region
    $region26: #{deep_count_autoencoder.2} parent=1 // pred_check
      _
    $region27: #{deep_count_autoencoder.2} parent=1 // pred_check_branch
      %437 = sbr.rel (0) target = $region29
    $region28: #{deep_count_autoencoder.2} parent=1 // pred_region
      _
    $region29: #{deep_count_autoencoder.2} parent=1 // pred_fallthru
      _
    %438 = vsyncpa [#allocation4], 1

// kernel: deep_count_autoencoder.3
$region0: #{deep_count_autoencoder.3}
  #allocation0 [shape = 'u32[]', space=smem, size = 0x4, offset = 0x4, fixed_abs, tag = 'smem constant byte address 0x4 - core index']
  #allocation1 [shape = 'u32[72,128]{1,0:T(1,128)}', space=vmem, size = 0x9000, scoped, tag = 'internal scratch']
  %s0 = inlined_call_operand.vmem [shape: f32[1,128,64], index: 0, kind: input, shape index: {}]
  %s1 = inlined_call_operand.vmem [shape: f32[1,64], index: 1, kind: input, shape index: {}]
  %s2 = inlined_call_operand.vmem [shape: f32[1,64], index: 2, kind: input, shape index: {}]
  %s3 = inlined_call_operand.vmem [shape: bf16[64,32], index: 3, kind: input, shape index: {}]
  %s4 = inlined_call_operand.vmem [shape: f32[1,32], index: 4, kind: input, shape index: {}]
  %s5 = inlined_call_operand.vmem [shape: f32[1,32], index: 5, kind: input, shape index: {}]
  %s6 = inlined_call_operand.vmem [shape: bf16[32,64], index: 6, kind: input, shape index: {}]
  %s7 = inlined_call_operand.vmem [shape: f32[1,64], index: 7, kind: input, shape index: {}]
  %s8 = inlined_call_operand.vmem [shape: f32[1,64], index: 8, kind: input, shape index: {}]
  %s9 = inlined_call_operand.vmem [shape: bf16[64,256], index: 9, kind: input, shape index: {}]
  %s10 = inlined_call_operand.vmem [shape: f32[1,256], index: 10, kind: input, shape index: {}]
  %s11 = inlined_call_operand.hbm [shape: bf16[128,256], index: 11, kind: output, shape index: {}]
  %s12 = sld [smem:[#allocation0]]
  $region54: #{deep_count_autoencoder.3} parent=0
    _
  %s14 = ssub.s32 1, %s12
  %s15 = scalar_select 0, %s14, %s12
  $region1: #{deep_count_autoencoder.3} parent=0
    #allocation2 [shape = 'u8[65536]{0}', space=vmem, size = 0x10000, scoped, tag = 'output window, operand 0, single buffered']
    #allocation3 [shape = 's32[1]{0}', space=sflag, size = 0x4, scoped, tag = 'scoped memory for deep_count_autoencoder.3']
    %16 = vsyncpa [#allocation3], 0
    // Predicated region
    $region2: #{deep_count_autoencoder.3} parent=1 // pred_check
      _
    $region3: #{deep_count_autoencoder.3} parent=1 // pred_check_branch
      %18 = sbr.rel (0) target = $region5
    $region4: #{deep_count_autoencoder.3} parent=1 // pred_region
      _
    $region5: #{deep_count_autoencoder.3} parent=1 // pred_fallthru
      _
    // Predicated region
    $region6: #{deep_count_autoencoder.3} parent=1 // pred_check
      _
    $region7: #{deep_count_autoencoder.3} parent=1 // pred_check_branch
      %20 = sbr.rel (0) target = $region9
    $region8: #{deep_count_autoencoder.3} parent=1 // pred_region
      _
    $region9: #{deep_count_autoencoder.3} parent=1 // pred_fallthru
      _
    // Predicated region
    $region10: #{deep_count_autoencoder.3} parent=1 // pred_check
      _
    $region11: #{deep_count_autoencoder.3} parent=1 // pred_check_branch
      %22 = sbr.rel (0) target = $region13
    $region12: #{deep_count_autoencoder.3} parent=1 // pred_region
      _
    $region13: #{deep_count_autoencoder.3} parent=1 // pred_fallthru
      _
    // Predicated region
    $region14: #{deep_count_autoencoder.3} parent=1 // pred_check
      _
    $region15: #{deep_count_autoencoder.3} parent=1 // pred_check_branch
      %24 = sbr.rel (0) target = $region17
    $region16: #{deep_count_autoencoder.3} parent=1 // pred_region
      _
    $region17: #{deep_count_autoencoder.3} parent=1 // pred_fallthru
      _
    // Predicated region
    $region18: #{deep_count_autoencoder.3} parent=1 // pred_check
      _
    $region19: #{deep_count_autoencoder.3} parent=1 // pred_check_branch
      %26 = sbr.rel (0) target = $region21
    $region20: #{deep_count_autoencoder.3} parent=1 // pred_region
      _
    $region21: #{deep_count_autoencoder.3} parent=1 // pred_fallthru
      _
    // Predicated region
    $region22: #{deep_count_autoencoder.3} parent=1 // pred_check
      _
    $region23: #{deep_count_autoencoder.3} parent=1 // pred_check_branch
      %28 = sbr.rel (0) target = $region25
    $region24: #{deep_count_autoencoder.3} parent=1 // pred_region
      _
    $region25: #{deep_count_autoencoder.3} parent=1 // pred_fallthru
      _
    // Predicated region
    $region26: #{deep_count_autoencoder.3} parent=1 // pred_check
      _
    $region27: #{deep_count_autoencoder.3} parent=1 // pred_check_branch
      %30 = sbr.rel (0) target = $region29
    $region28: #{deep_count_autoencoder.3} parent=1 // pred_region
      _
    $region29: #{deep_count_autoencoder.3} parent=1 // pred_fallthru
      _
    // Predicated region
    $region30: #{deep_count_autoencoder.3} parent=1 // pred_check
      _
    $region31: #{deep_count_autoencoder.3} parent=1 // pred_check_branch
      %32 = sbr.rel (0) target = $region33
    $region32: #{deep_count_autoencoder.3} parent=1 // pred_region
      _
    $region33: #{deep_count_autoencoder.3} parent=1 // pred_fallthru
      _
    // Predicated region
    $region34: #{deep_count_autoencoder.3} parent=1 // pred_check
      _
    $region35: #{deep_count_autoencoder.3} parent=1 // pred_check_branch
      %34 = sbr.rel (0) target = $region37
    $region36: #{deep_count_autoencoder.3} parent=1 // pred_region
      _
    $region37: #{deep_count_autoencoder.3} parent=1 // pred_fallthru
      _
    // Predicated region
    $region38: #{deep_count_autoencoder.3} parent=1 // pred_check
      _
    $region39: #{deep_count_autoencoder.3} parent=1 // pred_check_branch
      %36 = sbr.rel (0) target = $region41
    $region40: #{deep_count_autoencoder.3} parent=1 // pred_region
      _
    $region41: #{deep_count_autoencoder.3} parent=1 // pred_fallthru
      _
    // Predicated region
    $region42: #{deep_count_autoencoder.3} parent=1 // pred_check
      _
    $region43: #{deep_count_autoencoder.3} parent=1 // pred_check_branch
      %38 = sbr.rel (0) target = $region45
    $region44: #{deep_count_autoencoder.3} parent=1 // pred_region
      _
    $region45: #{deep_count_autoencoder.3} parent=1 // pred_fallthru
      _
    %v40 = vld [vmem:[%s0] sm:$0xff]
    %v41 = vld [vmem:[%s0 + $0x8] sm:$0xff]
    %v42 = vld [vmem:[%s0 + $0x10] sm:$0xff]
    %v43 = vld [vmem:[%s0 + $0x18] sm:$0xff]
    %v44 = vld [vmem:[%s0 + $0x20] sm:$0xff]
    %v45 = vld [vmem:[%s0 + $0x28] sm:$0xff]
    %v46 = vld [vmem:[%s0 + $0x30] sm:$0xff]
    %v47 = vld [vmem:[%s0 + $0x38] sm:$0xff]
    %v48 = vld [vmem:[%s0 + $0x40] sm:$0xff]
    %v49 = vld [vmem:[%s0 + $0x48] sm:$0xff]
    %v50 = vld [vmem:[%s0 + $0x50] sm:$0xff]
    %v51 = vld [vmem:[%s0 + $0x58] sm:$0xff]
    %v52 = vld [vmem:[%s0 + $0x60] sm:$0xff]
    %v53 = vld [vmem:[%s0 + $0x68] sm:$0xff]
    %v54 = vld [vmem:[%s0 + $0x70] sm:$0xff]
    %v55 = vld [vmem:[%s0 + $0x78] sm:$0xff]
    %v56 = vld [vmem:[%s1] sm:$0x1]
    %v57 = vld [vmem:[%s2] sm:$0x1]
    %vm58 = vcmask 523264
    %v59 = vsel %vm58, %v40, 0.0
    %v60 = vsel %vm58, %v41, 0.0
    %v61 = vadd.f32 %v59, %v60
    %v62 = vsel %vm58, %v42, 0.0
    %v63 = vadd.f32 %v61, %v62
    %v64 = vsel %vm58, %v43, 0.0
    %v65 = vadd.f32 %v63, %v64
    %v66 = vsel %vm58, %v44, 0.0
    %v67 = vadd.f32 %v65, %v66
    %v68 = vsel %vm58, %v45, 0.0
    %v69 = vadd.f32 %v67, %v68
    %v70 = vsel %vm58, %v46, 0.0
    %v71 = vadd.f32 %v69, %v70
    %v72 = vsel %vm58, %v47, 0.0
    %v73 = vadd.f32 %v71, %v72
    %v74 = vsel %vm58, %v48, 0.0
    %v75 = vadd.f32 %v73, %v74
    %v76 = vsel %vm58, %v49, 0.0
    %v77 = vadd.f32 %v75, %v76
    %v78 = vsel %vm58, %v50, 0.0
    %v79 = vadd.f32 %v77, %v78
    %v80 = vsel %vm58, %v51, 0.0
    %v81 = vadd.f32 %v79, %v80
    %v82 = vsel %vm58, %v52, 0.0
    %v83 = vadd.f32 %v81, %v82
    %v84 = vsel %vm58, %v53, 0.0
    %v85 = vadd.f32 %v83, %v84
    %v86 = vsel %vm58, %v54, 0.0
    %v87 = vadd.f32 %v85, %v86
    %v88 = vsel %vm58, %v55, 0.0
    %v89 = vadd.f32 %v87, %v88
    %v90 = vrot.slane %v89, 4
    %v91 = vadd.f32 %v89, %v90
    %v92 = vrot.slane %v91, 2
    %v93 = vadd.f32 %v91, %v92
    %v94 = vrot.slane %v93, 1
    %v95 = vadd.f32 %v93, %v94
    %v96 = vrcp.pop 128.0
    %v97 = vmul.f32 128.0, %v96
    %v98 = vsub.f32 1.0, %v97
    %v99 = vmul.f32 %v96, %v98
    %v100 = vadd.f32 %v96, %v99
    %vm101 = vweird.f32 %v96
    %v102 = vsel %vm101, %v96, %v100
    %v103 = vmul.f32 %v95, %v102
    %v104 = vsub.f32 %v40, %v103
    %v105 = vsub.f32 %v41, %v103
    %v106 = vsub.f32 %v42, %v103
    %v107 = vsub.f32 %v43, %v103
    %v108 = vsub.f32 %v44, %v103
    %v109 = vsub.f32 %v45, %v103
    %v110 = vsub.f32 %v46, %v103
    %v111 = vsub.f32 %v47, %v103
    %v112 = vsub.f32 %v48, %v103
    %v113 = vsub.f32 %v49, %v103
    %v114 = vsub.f32 %v50, %v103
    %v115 = vsub.f32 %v51, %v103
    %v116 = vsub.f32 %v52, %v103
    %v117 = vsub.f32 %v53, %v103
    %v118 = vsub.f32 %v54, %v103
    %v119 = vsub.f32 %v55, %v103
    %v120 = vmul.f32 %v104, %v104
    %v121 = vmul.f32 %v105, %v105
    %v122 = vmul.f32 %v106, %v106
    %v123 = vmul.f32 %v107, %v107
    %v124 = vmul.f32 %v108, %v108
    %v125 = vmul.f32 %v109, %v109
    %v126 = vmul.f32 %v110, %v110
    %v127 = vmul.f32 %v111, %v111
    %v128 = vmul.f32 %v112, %v112
    %v129 = vmul.f32 %v113, %v113
    %v130 = vmul.f32 %v114, %v114
    %v131 = vmul.f32 %v115, %v115
    %v132 = vmul.f32 %v116, %v116
    %v133 = vmul.f32 %v117, %v117
    %v134 = vmul.f32 %v118, %v118
    %v135 = vmul.f32 %v119, %v119
    %v136 = vsel %vm58, %v120, 0.0
    %v137 = vsel %vm58, %v121, 0.0
    %v138 = vadd.f32 %v136, %v137
    %v139 = vsel %vm58, %v122, 0.0
    %v140 = vadd.f32 %v138, %v139
    %v141 = vsel %vm58, %v123, 0.0
    %v142 = vadd.f32 %v140, %v141
    %v143 = vsel %vm58, %v124, 0.0
    %v144 = vadd.f32 %v142, %v143
    %v145 = vsel %vm58, %v125, 0.0
    %v146 = vadd.f32 %v144, %v145
    %v147 = vsel %vm58, %v126, 0.0
    %v148 = vadd.f32 %v146, %v147
    %v149 = vsel %vm58, %v127, 0.0
    %v150 = vadd.f32 %v148, %v149
    %v151 = vsel %vm58, %v128, 0.0
    %v152 = vadd.f32 %v150, %v151
    %v153 = vsel %vm58, %v129, 0.0
    %v154 = vadd.f32 %v152, %v153
    %v155 = vsel %vm58, %v130, 0.0
    %v156 = vadd.f32 %v154, %v155
    %v157 = vsel %vm58, %v131, 0.0
    %v158 = vadd.f32 %v156, %v157
    %v159 = vsel %vm58, %v132, 0.0
    %v160 = vadd.f32 %v158, %v159
    %v161 = vsel %vm58, %v133, 0.0
    %v162 = vadd.f32 %v160, %v161
    %v163 = vsel %vm58, %v134, 0.0
    %v164 = vadd.f32 %v162, %v163
    %v165 = vsel %vm58, %v135, 0.0
    %v166 = vadd.f32 %v164, %v165
    %v167 = vrot.slane %v166, 4
    %v168 = vadd.f32 %v166, %v167
    %v169 = vrot.slane %v168, 2
    %v170 = vadd.f32 %v168, %v169
    %v171 = vrot.slane %v170, 1
    %v172 = vadd.f32 %v170, %v171
    %v173 = vmul.f32 %v172, %v102
    %v174 = vadd.f32 %v173, 1e-05
    %v175 = vrsqrt.pop %v174
    %v176 = vmul.f32 %v175, %v174
    %v177 = vmul.f32 %v176, %v175
    %v178 = vmul.f32 0.5, %v177
    %v179 = vsub.f32 1.5, %v178
    %v180 = vmul.f32 %v175, %v179
    %vm181 = vweird.f32 %v174
    %vm182 = vweird.f32 %v175
    %vm183 = vmor %vm181, %vm182
    %v184 = vsel %vm183, %v175, %v180
    %v185 = vmul.f32 %v104, %v184
    %v186 = vmul.f32 %v105, %v184
    %v187 = vmul.f32 %v106, %v184
    %v188 = vmul.f32 %v107, %v184
    %v189 = vmul.f32 %v108, %v184
    %v190 = vmul.f32 %v109, %v184
    %v191 = vmul.f32 %v110, %v184
    %v192 = vmul.f32 %v111, %v184
    %v193 = vmul.f32 %v112, %v184
    %v194 = vmul.f32 %v113, %v184
    %v195 = vmul.f32 %v114, %v184
    %v196 = vmul.f32 %v115, %v184
    %v197 = vmul.f32 %v116, %v184
    %v198 = vmul.f32 %v117, %v184
    %v199 = vmul.f32 %v118, %v184
    %v200 = vmul.f32 %v119, %v184
    %v202 = vperm.slane %v56, 0
    %v204 = vmul.f32 %v185, %v202
    %v205 = vmul.f32 %v186, %v202
    %v206 = vmul.f32 %v187, %v202
    %v207 = vmul.f32 %v188, %v202
    %v208 = vmul.f32 %v189, %v202
    %v209 = vmul.f32 %v190, %v202
    %v210 = vmul.f32 %v191, %v202
    %v211 = vmul.f32 %v192, %v202
    %v212 = vmul.f32 %v193, %v202
    %v213 = vmul.f32 %v194, %v202
    %v214 = vmul.f32 %v195, %v202
    %v215 = vmul.f32 %v196, %v202
    %v216 = vmul.f32 %v197, %v202
    %v217 = vmul.f32 %v198, %v202
    %v218 = vmul.f32 %v199, %v202
    %v219 = vmul.f32 %v200, %v202
    %v221 = vperm.slane %v57, 0
    %v223 = vadd.f32 %v204, %v221
    %v224 = vadd.f32 %v205, %v221
    %v225 = vadd.f32 %v206, %v221
    %v226 = vadd.f32 %v207, %v221
    %v227 = vadd.f32 %v208, %v221
    %v228 = vadd.f32 %v209, %v221
    %v229 = vadd.f32 %v210, %v221
    %v230 = vadd.f32 %v211, %v221
    %v231 = vadd.f32 %v212, %v221
    %v232 = vadd.f32 %v213, %v221
    %v233 = vadd.f32 %v214, %v221
    %v234 = vadd.f32 %v215, %v221
    %v235 = vadd.f32 %v216, %v221
    %v236 = vadd.f32 %v217, %v221
    %v237 = vadd.f32 %v218, %v221
    %v238 = vadd.f32 %v219, %v221
    %v239 = vmax.f32 %v223, 0.0
    %v240 = vmax.f32 %v224, 0.0
    %v241 = vmax.f32 %v225, 0.0
    %v242 = vmax.f32 %v226, 0.0
    %v243 = vmax.f32 %v227, 0.0
    %v244 = vmax.f32 %v228, 0.0
    %v245 = vmax.f32 %v229, 0.0
    %v246 = vmax.f32 %v230, 0.0
    %v247 = vmax.f32 %v231, 0.0
    %v248 = vmax.f32 %v232, 0.0
    %v249 = vmax.f32 %v233, 0.0
    %v250 = vmax.f32 %v234, 0.0
    %v251 = vmax.f32 %v235, 0.0
    %v252 = vmax.f32 %v236, 0.0
    %v253 = vmax.f32 %v237, 0.0
    %v254 = vmax.f32 %v238, 0.0
    %v255 = vld [vmem:[%s3] sm:$0xf]
    %v256 = vld [vmem:[%s3 + $0x4] sm:$0xf]
    %v257 = vld [vmem:[%s3 + $0x8] sm:$0xf]
    %v258 = vld [vmem:[%s3 + $0xc] sm:$0xf]
    %v259 = vld [vmem:[%s3 + $0x10] sm:$0xf]
    %v260 = vld [vmem:[%s3 + $0x14] sm:$0xf]
    %v261 = vld [vmem:[%s3 + $0x18] sm:$0xf]
    %v262 = vld [vmem:[%s3 + $0x1c] sm:$0xf]
    %v263 = vld [vmem:[%s4] sm:$0x1]
    %v264 = vld [vmem:[%s5] sm:$0x1]
    %v265 = vpack.c.bf16 %v240, %v239
    %v266 = vpack.c.bf16 %v242, %v241
    %v267 = vpack.c.bf16 %v244, %v243
    %v268 = vpack.c.bf16 %v246, %v245
    %v269 = vpack.c.bf16 %v248, %v247
    %v270 = vpack.c.bf16 %v250, %v249
    %v271 = vpack.c.bf16 %v252, %v251
    %v272 = vpack.c.bf16 %v254, %v253
    %v281 = vunpack.c.l.b16 %v255
    %v282 = vunpack.c.l.b16 %v256
    %v283 = vunpack.c.l.b16 %v257
    %v284 = vunpack.c.l.b16 %v258
    %v285 = vunpack.c.l.b16 %v259
    %v286 = vunpack.c.l.b16 %v260
    %v287 = vunpack.c.l.b16 %v261
    %v288 = vunpack.c.l.b16 %v262
    %v289 = vpack.c.b16 %v282, %v281
    %v290 = vpack.c.b16 %v284, %v283
    %v291 = vpack.c.b16 %v286, %v285
    %v292 = vpack.c.b16 %v288, %v287
    %v298 = vsel %vm58, %v265, 0
    %v301 = vsel %vm58, %v266, 0
    %v304 = vsel %vm58, %v267, 0
    %v307 = vsel %vm58, %v268, 0
    %v310 = vsel %vm58, %v269, 0
    %v313 = vsel %vm58, %v270, 0
    %v316 = vsel %vm58, %v271, 0
    %v319 = vsel %vm58, %v272, 0
    %321 = vmatpush.bf16.msra.mxu0 0
    %322 = vmatpush.bf16.msra.mxu0 0
    %323 = vmatpush.bf16.msra.mxu0 0
    %324 = vmatpush.bf16.msra.mxu0 0
    %325 = vmatpush.bf16.msra.mxu0 %v292
    %326 = vmatpush.bf16.msra.mxu0 %v291
    %327 = vmatpush.bf16.msra.mxu0 %v290
    %328 = vmatpush.bf16.msra.mxu0 %v289
    %329 = vmatmul.bf16.gmra.mxu0 %v298
    %v330 = vpop.f32.mrf.mxu0
    %v331 = vadd.f32 0.0, %v330
    %v332 = vpop.f32.mrf.mxu0
    %v333 = vadd.f32 0.0, %v332
    %334 = vmatmul.bf16.gmra.mxu0 %v301
    %v335 = vpop.f32.mrf.mxu0
    %v336 = vadd.f32 0.0, %v335
    %v337 = vpop.f32.mrf.mxu0
    %v338 = vadd.f32 0.0, %v337
    %339 = vmatmul.bf16.gmra.mxu0 %v304
    %v340 = vpop.f32.mrf.mxu0
    %v341 = vadd.f32 0.0, %v340
    %v342 = vpop.f32.mrf.mxu0
    %v343 = vadd.f32 0.0, %v342
    %344 = vmatmul.bf16.gmra.mxu0 %v307
    %v345 = vpop.f32.mrf.mxu0
    %v346 = vadd.f32 0.0, %v345
    %v347 = vpop.f32.mrf.mxu0
    %v348 = vadd.f32 0.0, %v347
    %349 = vmatmul.bf16.gmra.mxu0 %v310
    %v350 = vpop.f32.mrf.mxu0
    %v351 = vadd.f32 0.0, %v350
    %v352 = vpop.f32.mrf.mxu0
    %v353 = vadd.f32 0.0, %v352
    %354 = vmatmul.bf16.gmra.mxu0 %v313
    %v355 = vpop.f32.mrf.mxu0
    %v356 = vadd.f32 0.0, %v355
    %v357 = vpop.f32.mrf.mxu0
    %v358 = vadd.f32 0.0, %v357
    %359 = vmatmul.bf16.gmra.mxu0 %v316
    %v360 = vpop.f32.mrf.mxu0
    %v361 = vadd.f32 0.0, %v360
    %v362 = vpop.f32.mrf.mxu0
    %v363 = vadd.f32 0.0, %v362
    %364 = vmatmul.bf16.gmra.mxu0 %v319
    %v365 = vpop.f32.mrf.mxu0
    %v366 = vadd.f32 0.0, %v365
    %v367 = vpop.f32.mrf.mxu0
    %v368 = vadd.f32 0.0, %v367
    %369 = vdwg.mxu0
    %vm370 = vcmask 261120
    %v371 = vsel %vm370, %v331, 0.0
    %v372 = vsel %vm370, %v333, 0.0
    %v373 = vadd.f32 %v371, %v372
    %v374 = vsel %vm370, %v336, 0.0
    %v375 = vadd.f32 %v373, %v374
    %v376 = vsel %vm370, %v338, 0.0
    %v377 = vadd.f32 %v375, %v376
    %v378 = vsel %vm370, %v341, 0.0
    %v379 = vadd.f32 %v377, %v378
    %v380 = vsel %vm370, %v343, 0.0
    %v381 = vadd.f32 %v379, %v380
    %v382 = vsel %vm370, %v346, 0.0
    %v383 = vadd.f32 %v381, %v382
    %v384 = vsel %vm370, %v348, 0.0
    %v385 = vadd.f32 %v383, %v384
    %v386 = vsel %vm370, %v351, 0.0
    %v387 = vadd.f32 %v385, %v386
    %v388 = vsel %vm370, %v353, 0.0
    %v389 = vadd.f32 %v387, %v388
    %v390 = vsel %vm370, %v356, 0.0
    %v391 = vadd.f32 %v389, %v390
    %v392 = vsel %vm370, %v358, 0.0
    %v393 = vadd.f32 %v391, %v392
    %v394 = vsel %vm370, %v361, 0.0
    %v395 = vadd.f32 %v393, %v394
    %v396 = vsel %vm370, %v363, 0.0
    %v397 = vadd.f32 %v395, %v396
    %v398 = vsel %vm370, %v366, 0.0
    %v399 = vadd.f32 %v397, %v398
    %v400 = vsel %vm370, %v368, 0.0
    %v401 = vadd.f32 %v399, %v400
    %v402 = vrot.slane %v401, 4
    %v403 = vadd.f32 %v401, %v402
    %v404 = vrot.slane %v403, 2
    %v405 = vadd.f32 %v403, %v404
    %v406 = vrot.slane %v405, 1
    %v407 = vadd.f32 %v405, %v406
    %v408 = vmul.f32 %v407, %v102
    %v409 = vsub.f32 %v331, %v408
    %v410 = vsub.f32 %v333, %v408
    %v411 = vsub.f32 %v336, %v408
    %v412 = vsub.f32 %v338, %v408
    %v413 = vsub.f32 %v341, %v408
    %v414 = vsub.f32 %v343, %v408
    %v415 = vsub.f32 %v346, %v408
    %v416 = vsub.f32 %v348, %v408
    %v417 = vsub.f32 %v351, %v408
    %v418 = vsub.f32 %v353, %v408
    %v419 = vsub.f32 %v356, %v408
    %v420 = vsub.f32 %v358, %v408
    %v421 = vsub.f32 %v361, %v408
    %v422 = vsub.f32 %v363, %v408
    %v423 = vsub.f32 %v366, %v408
    %v424 = vsub.f32 %v368, %v408
    %v425 = vmul.f32 %v409, %v409
    %v426 = vmul.f32 %v410, %v410
    %v427 = vmul.f32 %v411, %v411
    %v428 = vmul.f32 %v412, %v412
    %v429 = vmul.f32 %v413, %v413
    %v430 = vmul.f32 %v414, %v414
    %v431 = vmul.f32 %v415, %v415
    %v432 = vmul.f32 %v416, %v416
    %v433 = vmul.f32 %v417, %v417
    %v434 = vmul.f32 %v418, %v418
    %v435 = vmul.f32 %v419, %v419
    %v436 = vmul.f32 %v420, %v420
    %v437 = vmul.f32 %v421, %v421
    %v438 = vmul.f32 %v422, %v422
    %v439 = vmul.f32 %v423, %v423
    %v440 = vmul.f32 %v424, %v424
    %v441 = vsel %vm370, %v425, 0.0
    %v442 = vsel %vm370, %v426, 0.0
    %v443 = vadd.f32 %v441, %v442
    %v444 = vsel %vm370, %v427, 0.0
    %v445 = vadd.f32 %v443, %v444
    %v446 = vsel %vm370, %v428, 0.0
    %v447 = vadd.f32 %v445, %v446
    %v448 = vsel %vm370, %v429, 0.0
    %v449 = vadd.f32 %v447, %v448
    %v450 = vsel %vm370, %v430, 0.0
    %v451 = vadd.f32 %v449, %v450
    %v452 = vsel %vm370, %v431, 0.0
    %v453 = vadd.f32 %v451, %v452
    %v454 = vsel %vm370, %v432, 0.0
    %v455 = vadd.f32 %v453, %v454
    %v456 = vsel %vm370, %v433, 0.0
    %v457 = vadd.f32 %v455, %v456
    %v458 = vsel %vm370, %v434, 0.0
    %v459 = vadd.f32 %v457, %v458
    %v460 = vsel %vm370, %v435, 0.0
    %v461 = vadd.f32 %v459, %v460
    %v462 = vsel %vm370, %v436, 0.0
    %v463 = vadd.f32 %v461, %v462
    %v464 = vsel %vm370, %v437, 0.0
    %v465 = vadd.f32 %v463, %v464
    %v466 = vsel %vm370, %v438, 0.0
    %v467 = vadd.f32 %v465, %v466
    %v468 = vsel %vm370, %v439, 0.0
    %v469 = vadd.f32 %v467, %v468
    %v470 = vsel %vm370, %v440, 0.0
    %v471 = vadd.f32 %v469, %v470
    %v472 = vrot.slane %v471, 4
    %v473 = vadd.f32 %v471, %v472
    %v474 = vrot.slane %v473, 2
    %v475 = vadd.f32 %v473, %v474
    %v476 = vrot.slane %v475, 1
    %v477 = vadd.f32 %v475, %v476
    %v478 = vmul.f32 %v477, %v102
    %v479 = vadd.f32 %v478, 1e-05
    %v480 = vrsqrt.pop %v479
    %v481 = vmul.f32 %v480, %v479
    %v482 = vmul.f32 %v481, %v480
    %v483 = vmul.f32 0.5, %v482
    %v484 = vsub.f32 1.5, %v483
    %v485 = vmul.f32 %v480, %v484
    %vm486 = vweird.f32 %v479
    %vm487 = vweird.f32 %v480
    %vm488 = vmor %vm486, %vm487
    %v489 = vsel %vm488, %v480, %v485
    %v490 = vmul.f32 %v409, %v489
    %v491 = vmul.f32 %v410, %v489
    %v492 = vmul.f32 %v411, %v489
    %v493 = vmul.f32 %v412, %v489
    %v494 = vmul.f32 %v413, %v489
    %v495 = vmul.f32 %v414, %v489
    %v496 = vmul.f32 %v415, %v489
    %v497 = vmul.f32 %v416, %v489
    %v498 = vmul.f32 %v417, %v489
    %v499 = vmul.f32 %v418, %v489
    %v500 = vmul.f32 %v419, %v489
    %v501 = vmul.f32 %v420, %v489
    %v502 = vmul.f32 %v421, %v489
    %v503 = vmul.f32 %v422, %v489
    %v504 = vmul.f32 %v423, %v489
    %v505 = vmul.f32 %v424, %v489
    %v507 = vperm.slane %v263, 0
    %v509 = vmul.f32 %v490, %v507
    %v510 = vmul.f32 %v491, %v507
    %v511 = vmul.f32 %v492, %v507
    %v512 = vmul.f32 %v493, %v507
    %v513 = vmul.f32 %v494, %v507
    %v514 = vmul.f32 %v495, %v507
    %v515 = vmul.f32 %v496, %v507
    %v516 = vmul.f32 %v497, %v507
    %v517 = vmul.f32 %v498, %v507
    %v518 = vmul.f32 %v499, %v507
    %v519 = vmul.f32 %v500, %v507
    %v520 = vmul.f32 %v501, %v507
    %v521 = vmul.f32 %v502, %v507
    %v522 = vmul.f32 %v503, %v507
    %v523 = vmul.f32 %v504, %v507
    %v524 = vmul.f32 %v505, %v507
    %v526 = vperm.slane %v264, 0
    %v528 = vadd.f32 %v509, %v526
    %v529 = vadd.f32 %v510, %v526
    %v530 = vadd.f32 %v511, %v526
    %v531 = vadd.f32 %v512, %v526
    %v532 = vadd.f32 %v513, %v526
    %v533 = vadd.f32 %v514, %v526
    %v534 = vadd.f32 %v515, %v526
    %v535 = vadd.f32 %v516, %v526
    %v536 = vadd.f32 %v517, %v526
    %v537 = vadd.f32 %v518, %v526
    %v538 = vadd.f32 %v519, %v526
    %v539 = vadd.f32 %v520, %v526
    %v540 = vadd.f32 %v521, %v526
    %v541 = vadd.f32 %v522, %v526
    %v542 = vadd.f32 %v523, %v526
    %v543 = vadd.f32 %v524, %v526
    %v544 = vmax.f32 %v528, 0.0
    %v545 = vmax.f32 %v529, 0.0
    %v546 = vmax.f32 %v530, 0.0
    %v547 = vmax.f32 %v531, 0.0
    %v548 = vmax.f32 %v532, 0.0
    %v549 = vmax.f32 %v533, 0.0
    %v550 = vmax.f32 %v534, 0.0
    %v551 = vmax.f32 %v535, 0.0
    %v552 = vmax.f32 %v536, 0.0
    %v553 = vmax.f32 %v537, 0.0
    %v554 = vmax.f32 %v538, 0.0
    %v555 = vmax.f32 %v539, 0.0
    %v556 = vmax.f32 %v540, 0.0
    %v557 = vmax.f32 %v541, 0.0
    %v558 = vmax.f32 %v542, 0.0
    %v559 = vmax.f32 %v543, 0.0
    %v560 = vld [vmem:[%s6] sm:$0xf]
    %v561 = vld [vmem:[%s6 + $0x4] sm:$0xf]
    %v562 = vld [vmem:[%s6 + $0x8] sm:$0xf]
    %v563 = vld [vmem:[%s6 + $0xc] sm:$0xf]
    %v564 = vld [vmem:[%s7] sm:$0x1]
    %v565 = vld [vmem:[%s8] sm:$0x1]
    %v566 = vpack.c.bf16 %v545, %v544
    %v567 = vpack.c.bf16 %v547, %v546
    %v568 = vpack.c.bf16 %v549, %v548
    %v569 = vpack.c.bf16 %v551, %v550
    %v570 = vpack.c.bf16 %v553, %v552
    %v571 = vpack.c.bf16 %v555, %v554
    %v572 = vpack.c.bf16 %v557, %v556
    %v573 = vpack.c.bf16 %v559, %v558
    %v578 = vunpack.c.l.b16 %v560
    %v579 = vunpack.c.l.b16 %v561
    %v580 = vunpack.c.l.b16 %v562
    %v581 = vunpack.c.l.b16 %v563
    %v582 = vpack.c.b16 %v579, %v578
    %v583 = vpack.c.b16 %v581, %v580
    %v587 = vsel %vm370, %v566, 0
    %v590 = vsel %vm370, %v567, 0
    %v593 = vsel %vm370, %v568, 0
    %v596 = vsel %vm370, %v569, 0
    %v599 = vsel %vm370, %v570, 0
    %v602 = vsel %vm370, %v571, 0
    %v605 = vsel %vm370, %v572, 0
    %v608 = vsel %vm370, %v573, 0
    %610 = vmatpush.bf16.msra.mxu0 0
    %611 = vmatpush.bf16.msra.mxu0 0
    %612 = vmatpush.bf16.msra.mxu0 0
    %613 = vmatpush.bf16.msra.mxu0 0
    %614 = vmatpush.bf16.msra.mxu0 0
    %615 = vmatpush.bf16.msra.mxu0 0
    %616 = vmatpush.bf16.msra.mxu0 %v583
    %617 = vmatpush.bf16.msra.mxu0 %v582
    %618 = vmatmul.bf16.gmra.mxu0 %v587
    %v619 = vpop.f32.mrf.mxu0
    %v620 = vadd.f32 0.0, %v619
    %v621 = vpop.f32.mrf.mxu0
    %v622 = vadd.f32 0.0, %v621
    %623 = vmatmul.bf16.gmra.mxu0 %v590
    %v624 = vpop.f32.mrf.mxu0
    %v625 = vadd.f32 0.0, %v624
    %v626 = vpop.f32.mrf.mxu0
    %v627 = vadd.f32 0.0, %v626
    %628 = vmatmul.bf16.gmra.mxu0 %v593
    %v629 = vpop.f32.mrf.mxu0
    %v630 = vadd.f32 0.0, %v629
    %v631 = vpop.f32.mrf.mxu0
    %v632 = vadd.f32 0.0, %v631
    %633 = vmatmul.bf16.gmra.mxu0 %v596
    %v634 = vpop.f32.mrf.mxu0
    %v635 = vadd.f32 0.0, %v634
    %v636 = vpop.f32.mrf.mxu0
    %v637 = vadd.f32 0.0, %v636
    %638 = vmatmul.bf16.gmra.mxu0 %v599
    %v639 = vpop.f32.mrf.mxu0
    %v640 = vadd.f32 0.0, %v639
    %v641 = vpop.f32.mrf.mxu0
    %v642 = vadd.f32 0.0, %v641
    %643 = vmatmul.bf16.gmra.mxu0 %v602
    %v644 = vpop.f32.mrf.mxu0
    %v645 = vadd.f32 0.0, %v644
    %v646 = vpop.f32.mrf.mxu0
    %v647 = vadd.f32 0.0, %v646
    %648 = vmatmul.bf16.gmra.mxu0 %v605
    %v649 = vpop.f32.mrf.mxu0
    %v650 = vadd.f32 0.0, %v649
    %v651 = vpop.f32.mrf.mxu0
    %v652 = vadd.f32 0.0, %v651
    %653 = vmatmul.bf16.gmra.mxu0 %v608
    %v654 = vpop.f32.mrf.mxu0
    %v655 = vadd.f32 0.0, %v654
    %v656 = vpop.f32.mrf.mxu0
    %v657 = vadd.f32 0.0, %v656
    %658 = vdwg.mxu0
    %v659 = vsel %vm58, %v620, 0.0
    %v660 = vsel %vm58, %v622, 0.0
    %v661 = vadd.f32 %v659, %v660
    %v662 = vsel %vm58, %v625, 0.0
    %v663 = vadd.f32 %v661, %v662
    %v664 = vsel %vm58, %v627, 0.0
    %v665 = vadd.f32 %v663, %v664
    %v666 = vsel %vm58, %v630, 0.0
    %v667 = vadd.f32 %v665, %v666
    %v668 = vsel %vm58, %v632, 0.0
    %v669 = vadd.f32 %v667, %v668
    %v670 = vsel %vm58, %v635, 0.0
    %v671 = vadd.f32 %v669, %v670
    %v672 = vsel %vm58, %v637, 0.0
    %v673 = vadd.f32 %v671, %v672
    %v674 = vsel %vm58, %v640, 0.0
    %v675 = vadd.f32 %v673, %v674
    %v676 = vsel %vm58, %v642, 0.0
    %v677 = vadd.f32 %v675, %v676
    %v678 = vsel %vm58, %v645, 0.0
    %v679 = vadd.f32 %v677, %v678
    %v680 = vsel %vm58, %v647, 0.0
    %v681 = vadd.f32 %v679, %v680
    %v682 = vsel %vm58, %v650, 0.0
    %v683 = vadd.f32 %v681, %v682
    %v684 = vsel %vm58, %v652, 0.0
    %v685 = vadd.f32 %v683, %v684
    %v686 = vsel %vm58, %v655, 0.0
    %v687 = vadd.f32 %v685, %v686
    %v688 = vsel %vm58, %v657, 0.0
    %v689 = vadd.f32 %v687, %v688
    %v690 = vrot.slane %v689, 4
    %v691 = vadd.f32 %v689, %v690
    %v692 = vrot.slane %v691, 2
    %v693 = vadd.f32 %v691, %v692
    %v694 = vrot.slane %v693, 1
    %v695 = vadd.f32 %v693, %v694
    %v696 = vmul.f32 %v695, %v102
    %v697 = vsub.f32 %v620, %v696
    %v698 = vsub.f32 %v622, %v696
    %v699 = vsub.f32 %v625, %v696
    %v700 = vsub.f32 %v627, %v696
    %v701 = vsub.f32 %v630, %v696
    %v702 = vsub.f32 %v632, %v696
    %v703 = vsub.f32 %v635, %v696
    %v704 = vsub.f32 %v637, %v696
    %v705 = vsub.f32 %v640, %v696
    %v706 = vsub.f32 %v642, %v696
    %v707 = vsub.f32 %v645, %v696
    %v708 = vsub.f32 %v647, %v696
    %v709 = vsub.f32 %v650, %v696
    %v710 = vsub.f32 %v652, %v696
    %v711 = vsub.f32 %v655, %v696
    %v712 = vsub.f32 %v657, %v696
    %v713 = vmul.f32 %v697, %v697
    %v714 = vmul.f32 %v698, %v698
    %v715 = vmul.f32 %v699, %v699
    %v716 = vmul.f32 %v700, %v700
    %v717 = vmul.f32 %v701, %v701
    %v718 = vmul.f32 %v702, %v702
    %v719 = vmul.f32 %v703, %v703
    %v720 = vmul.f32 %v704, %v704
    %v721 = vmul.f32 %v705, %v705
    %v722 = vmul.f32 %v706, %v706
    %v723 = vmul.f32 %v707, %v707
    %v724 = vmul.f32 %v708, %v708
    %v725 = vmul.f32 %v709, %v709
    %v726 = vmul.f32 %v710, %v710
    %v727 = vmul.f32 %v711, %v711
    %v728 = vmul.f32 %v712, %v712
    %v729 = vsel %vm58, %v713, 0.0
    %v730 = vsel %vm58, %v714, 0.0
    %v731 = vadd.f32 %v729, %v730
    %v732 = vsel %vm58, %v715, 0.0
    %v733 = vadd.f32 %v731, %v732
    %v734 = vsel %vm58, %v716, 0.0
    %v735 = vadd.f32 %v733, %v734
    %v736 = vsel %vm58, %v717, 0.0
    %v737 = vadd.f32 %v735, %v736
    %v738 = vsel %vm58, %v718, 0.0
    %v739 = vadd.f32 %v737, %v738
    %v740 = vsel %vm58, %v719, 0.0
    %v741 = vadd.f32 %v739, %v740
    %v742 = vsel %vm58, %v720, 0.0
    %v743 = vadd.f32 %v741, %v742
    %v744 = vsel %vm58, %v721, 0.0
    %v745 = vadd.f32 %v743, %v744
    %v746 = vsel %vm58, %v722, 0.0
    %v747 = vadd.f32 %v745, %v746
    %v748 = vsel %vm58, %v723, 0.0
    %v749 = vadd.f32 %v747, %v748
    %v750 = vsel %vm58, %v724, 0.0
    %v751 = vadd.f32 %v749, %v750
    %v752 = vsel %vm58, %v725, 0.0
    %v753 = vadd.f32 %v751, %v752
    %v754 = vsel %vm58, %v726, 0.0
    %v755 = vadd.f32 %v753, %v754
    %v756 = vsel %vm58, %v727, 0.0
    %v757 = vadd.f32 %v755, %v756
    %v758 = vsel %vm58, %v728, 0.0
    %v759 = vadd.f32 %v757, %v758
    %v760 = vrot.slane %v759, 4
    %v761 = vadd.f32 %v759, %v760
    %v762 = vrot.slane %v761, 2
    %v763 = vadd.f32 %v761, %v762
    %v764 = vrot.slane %v763, 1
    %v765 = vadd.f32 %v763, %v764
    %v766 = vmul.f32 %v765, %v102
    %v767 = vadd.f32 %v766, 1e-05
    %v768 = vrsqrt.pop %v767
    %v769 = vmul.f32 %v768, %v767
    %v770 = vmul.f32 %v769, %v768
    %v771 = vmul.f32 0.5, %v770
    %v772 = vsub.f32 1.5, %v771
    %v773 = vmul.f32 %v768, %v772
    %vm774 = vweird.f32 %v767
    %vm775 = vweird.f32 %v768
    %vm776 = vmor %vm774, %vm775
    %v777 = vsel %vm776, %v768, %v773
    %v778 = vmul.f32 %v697, %v777
    %v779 = vmul.f32 %v698, %v777
    %v780 = vmul.f32 %v699, %v777
    %v781 = vmul.f32 %v700, %v777
    %v782 = vmul.f32 %v701, %v777
    %v783 = vmul.f32 %v702, %v777
    %v784 = vmul.f32 %v703, %v777
    %v785 = vmul.f32 %v704, %v777
    %v786 = vmul.f32 %v705, %v777
    %v787 = vmul.f32 %v706, %v777
    %v788 = vmul.f32 %v707, %v777
    %v789 = vmul.f32 %v708, %v777
    %v790 = vmul.f32 %v709, %v777
    %v791 = vmul.f32 %v710, %v777
    %v792 = vmul.f32 %v711, %v777
    %v793 = vmul.f32 %v712, %v777
    %v795 = vperm.slane %v564, 0
    %v797 = vmul.f32 %v778, %v795
    %v798 = vmul.f32 %v779, %v795
    %v799 = vmul.f32 %v780, %v795
    %v800 = vmul.f32 %v781, %v795
    %v801 = vmul.f32 %v782, %v795
    %v802 = vmul.f32 %v783, %v795
    %v803 = vmul.f32 %v784, %v795
    %v804 = vmul.f32 %v785, %v795
    %v805 = vmul.f32 %v786, %v795
    %v806 = vmul.f32 %v787, %v795
    %v807 = vmul.f32 %v788, %v795
    %v808 = vmul.f32 %v789, %v795
    %v809 = vmul.f32 %v790, %v795
    %v810 = vmul.f32 %v791, %v795
    %v811 = vmul.f32 %v792, %v795
    %v812 = vmul.f32 %v793, %v795
    %v814 = vperm.slane %v565, 0
    %v816 = vadd.f32 %v797, %v814
    %v817 = vadd.f32 %v798, %v814
    %v818 = vadd.f32 %v799, %v814
    %v819 = vadd.f32 %v800, %v814
    %v820 = vadd.f32 %v801, %v814
    %v821 = vadd.f32 %v802, %v814
    %v822 = vadd.f32 %v803, %v814
    %v823 = vadd.f32 %v804, %v814
    %v824 = vadd.f32 %v805, %v814
    %v825 = vadd.f32 %v806, %v814
    %v826 = vadd.f32 %v807, %v814
    %v827 = vadd.f32 %v808, %v814
    %v828 = vadd.f32 %v809, %v814
    %v829 = vadd.f32 %v810, %v814
    %v830 = vadd.f32 %v811, %v814
    %v831 = vadd.f32 %v812, %v814
    %v832 = vmax.f32 %v816, 0.0
    %v833 = vmax.f32 %v817, 0.0
    %v834 = vmax.f32 %v818, 0.0
    %v835 = vmax.f32 %v819, 0.0
    %v836 = vmax.f32 %v820, 0.0
    %v837 = vmax.f32 %v821, 0.0
    %v838 = vmax.f32 %v822, 0.0
    %v839 = vmax.f32 %v823, 0.0
    %v840 = vmax.f32 %v824, 0.0
    %v841 = vmax.f32 %v825, 0.0
    %v842 = vmax.f32 %v826, 0.0
    %v843 = vmax.f32 %v827, 0.0
    %v844 = vmax.f32 %v828, 0.0
    %v845 = vmax.f32 %v829, 0.0
    %v846 = vmax.f32 %v830, 0.0
    %v847 = vmax.f32 %v831, 0.0
    %v848 = vpack.c.bf16 %v833, %v832
    %v849 = vpack.c.bf16 %v835, %v834
    %v850 = vpack.c.bf16 %v837, %v836
    %v851 = vpack.c.bf16 %v839, %v838
    %v852 = vpack.c.bf16 %v841, %v840
    %v853 = vpack.c.bf16 %v843, %v842
    %v854 = vpack.c.bf16 %v845, %v844
    %v855 = vpack.c.bf16 %v847, %v846
    %v856 = vld [vmem:[%s9] sm:$0xff]
    %v857 = vld [vmem:[%s9 + $0x8] sm:$0xff]
    %v858 = vld [vmem:[%s9 + $0x10] sm:$0xff]
    %v859 = vld [vmem:[%s9 + $0x18] sm:$0xff]
    %v860 = vld [vmem:[%s9 + $0x20] sm:$0xff]
    %v861 = vld [vmem:[%s9 + $0x28] sm:$0xff]
    %v862 = vld [vmem:[%s9 + $0x30] sm:$0xff]
    %v863 = vld [vmem:[%s9 + $0x38] sm:$0xff]
    %v864 = vld [vmem:[%s10] sm:$0x3]
    %v866 = vperm.slane %v864, 0
    %v867 = vperm.slane %v864, 1
    %v878 = vunpack.c.l.b16 %v856
    %v879 = vunpack.c.h.b16 %v856
    %v880 = vunpack.c.l.b16 %v857
    %v881 = vunpack.c.h.b16 %v857
    %v882 = vunpack.c.l.b16 %v858
    %v883 = vunpack.c.h.b16 %v858
    %v884 = vunpack.c.l.b16 %v859
    %v885 = vunpack.c.h.b16 %v859
    %v886 = vunpack.c.l.b16 %v860
    %v887 = vunpack.c.h.b16 %v860
    %v888 = vunpack.c.l.b16 %v861
    %v889 = vunpack.c.h.b16 %v861
    %v890 = vunpack.c.l.b16 %v862
    %v891 = vunpack.c.h.b16 %v862
    %v892 = vunpack.c.l.b16 %v863
    %v893 = vunpack.c.h.b16 %v863
    %v894 = vpack.c.b16 %v880, %v878
    %v895 = vpack.c.b16 %v881, %v879
    %v896 = vpack.c.b16 %v884, %v882
    %v897 = vpack.c.b16 %v885, %v883
    %v898 = vpack.c.b16 %v888, %v886
    %v899 = vpack.c.b16 %v889, %v887
    %v900 = vpack.c.b16 %v892, %v890
    %v901 = vpack.c.b16 %v893, %v891
    %v911 = vsel %vm58, %v848, 0
    %v914 = vsel %vm58, %v849, 0
    %v917 = vsel %vm58, %v850, 0
    %v920 = vsel %vm58, %v851, 0
    %v923 = vsel %vm58, %v852, 0
    %v926 = vsel %vm58, %v853, 0
    %v929 = vsel %vm58, %v854, 0
    %v932 = vsel %vm58, %v855, 0
    %934 = vmatpush.bf16.msra.mxu0 0
    %935 = vmatpush.bf16.msra.mxu0 0
    %936 = vmatpush.bf16.msra.mxu0 0
    %937 = vmatpush.bf16.msra.mxu0 0
    %938 = vmatpush.bf16.msra.mxu0 %v900
    %939 = vmatpush.bf16.msra.mxu0 %v898
    %940 = vmatpush.bf16.msra.mxu0 %v896
    %941 = vmatpush.bf16.msra.mxu0 %v894
    %942 = vmatmul.bf16.gmra.mxu0 %v911
    %v943 = vpop.f32.mrf.mxu0
    %v944 = vadd.f32 %v866, %v943
    %v945 = vpop.f32.mrf.mxu0
    %v946 = vadd.f32 %v866, %v945
    %947 = vmatmul.bf16.gmra.mxu0 %v914
    %v948 = vpop.f32.mrf.mxu0
    %v949 = vadd.f32 %v866, %v948
    %v950 = vpop.f32.mrf.mxu0
    %v951 = vadd.f32 %v866, %v950
    %952 = vmatmul.bf16.gmra.mxu0 %v917
    %v953 = vpop.f32.mrf.mxu0
    %v954 = vadd.f32 %v866, %v953
    %v955 = vpop.f32.mrf.mxu0
    %v956 = vadd.f32 %v866, %v955
    %957 = vmatmul.bf16.gmra.mxu0 %v920
    %v958 = vpop.f32.mrf.mxu0
    %v959 = vadd.f32 %v866, %v958
    %v960 = vpop.f32.mrf.mxu0
    %v961 = vadd.f32 %v866, %v960
    %962 = vmatmul.bf16.gmra.mxu0 %v923
    %v963 = vpop.f32.mrf.mxu0
    %v964 = vadd.f32 %v866, %v963
    %v965 = vpop.f32.mrf.mxu0
    %v966 = vadd.f32 %v866, %v965
    %967 = vmatmul.bf16.gmra.mxu0 %v926
    %v968 = vpop.f32.mrf.mxu0
    %v969 = vadd.f32 %v866, %v968
    %v970 = vpop.f32.mrf.mxu0
    %v971 = vadd.f32 %v866, %v970
    %972 = vmatmul.bf16.gmra.mxu0 %v929
    %v973 = vpop.f32.mrf.mxu0
    %v974 = vadd.f32 %v866, %v973
    %v975 = vpop.f32.mrf.mxu0
    %v976 = vadd.f32 %v866, %v975
    %977 = vmatmul.bf16.gmra.mxu0 %v932
    %v978 = vpop.f32.mrf.mxu0
    %v979 = vadd.f32 %v866, %v978
    %v980 = vpop.f32.mrf.mxu0
    %v981 = vadd.f32 %v866, %v980
    %982 = vdwg.mxu0
    %983 = vmatpush.bf16.msra.mxu0 0
    %984 = vmatpush.bf16.msra.mxu0 0
    %985 = vmatpush.bf16.msra.mxu0 0
    %986 = vmatpush.bf16.msra.mxu0 0
    %987 = vmatpush.bf16.msra.mxu0 %v901
    %988 = vmatpush.bf16.msra.mxu0 %v899
    %989 = vmatpush.bf16.msra.mxu0 %v897
    %990 = vmatpush.bf16.msra.mxu0 %v895
    %991 = vmatmul.bf16.gmra.mxu0 %v911
    %v992 = vpop.f32.mrf.mxu0
    %v993 = vadd.f32 %v867, %v992
    %v994 = vpop.f32.mrf.mxu0
    %v995 = vadd.f32 %v867, %v994
    %996 = vmatmul.bf16.gmra.mxu0 %v914
    %v997 = vpop.f32.mrf.mxu0
    %v998 = vadd.f32 %v867, %v997
    %v999 = vpop.f32.mrf.mxu0
    %v1000 = vadd.f32 %v867, %v999
    %1001 = vmatmul.bf16.gmra.mxu0 %v917
    %v1002 = vpop.f32.mrf.mxu0
    %v1003 = vadd.f32 %v867, %v1002
    %v1004 = vpop.f32.mrf.mxu0
    %v1005 = vadd.f32 %v867, %v1004
    %1006 = vmatmul.bf16.gmra.mxu0 %v920
    %v1007 = vpop.f32.mrf.mxu0
    %v1008 = vadd.f32 %v867, %v1007
    %v1009 = vpop.f32.mrf.mxu0
    %v1010 = vadd.f32 %v867, %v1009
    %1011 = vmatmul.bf16.gmra.mxu0 %v923
    %v1012 = vpop.f32.mrf.mxu0
    %v1013 = vadd.f32 %v867, %v1012
    %v1014 = vpop.f32.mrf.mxu0
    %v1015 = vadd.f32 %v867, %v1014
    %1016 = vmatmul.bf16.gmra.mxu0 %v926
    %v1017 = vpop.f32.mrf.mxu0
    %v1018 = vadd.f32 %v867, %v1017
    %v1019 = vpop.f32.mrf.mxu0
    %v1020 = vadd.f32 %v867, %v1019
    %1021 = vmatmul.bf16.gmra.mxu0 %v929
    %v1022 = vpop.f32.mrf.mxu0
    %v1023 = vadd.f32 %v867, %v1022
    %v1024 = vpop.f32.mrf.mxu0
    %v1025 = vadd.f32 %v867, %v1024
    %1026 = vmatmul.bf16.gmra.mxu0 %v932
    %v1027 = vpop.f32.mrf.mxu0
    %v1028 = vadd.f32 %v867, %v1027
    %v1029 = vpop.f32.mrf.mxu0
    %v1030 = vadd.f32 %v867, %v1029
    %1031 = vdwg.mxu0
    %v1032 = vmul.f32 %v944, 1.442695
    %v1033 = vpow.pop %v1032
    %v1034 = vmul.f32 %v993, 1.442695
    %v1035 = vpow.pop %v1034
    %v1036 = vmul.f32 %v946, 1.442695
    %v1037 = vpow.pop %v1036
    %v1038 = vmul.f32 %v995, 1.442695
    %v1039 = vpow.pop %v1038
    %v1040 = vmul.f32 %v949, 1.442695
    %v1041 = vpow.pop %v1040
    %v1042 = vmul.f32 %v998, 1.442695
    %v1043 = vpow.pop %v1042
    %v1044 = vmul.f32 %v951, 1.442695
    %v1045 = vpow.pop %v1044
    %v1046 = vmul.f32 %v1000, 1.442695
    %v1047 = vpow.pop %v1046
    %v1048 = vmul.f32 %v954, 1.442695
    %v1049 = vpow.pop %v1048
    %v1050 = vmul.f32 %v1003, 1.442695
    %v1051 = vpow.pop %v1050
    %v1052 = vmul.f32 %v956, 1.442695
    %v1053 = vpow.pop %v1052
    %v1054 = vmul.f32 %v1005, 1.442695
    %v1055 = vpow.pop %v1054
    %v1056 = vmul.f32 %v959, 1.442695
    %v1057 = vpow.pop %v1056
    %v1058 = vmul.f32 %v1008, 1.442695
    %v1059 = vpow.pop %v1058
    %v1060 = vmul.f32 %v961, 1.442695
    %v1061 = vpow.pop %v1060
    %v1062 = vmul.f32 %v1010, 1.442695
    %v1063 = vpow.pop %v1062
    %v1064 = vmul.f32 %v964, 1.442695
    %v1065 = vpow.pop %v1064
    %v1066 = vmul.f32 %v1013, 1.442695
    %v1067 = vpow.pop %v1066
    %v1068 = vmul.f32 %v966, 1.442695
    %v1069 = vpow.pop %v1068
    %v1070 = vmul.f32 %v1015, 1.442695
    %v1071 = vpow.pop %v1070
    %v1072 = vmul.f32 %v969, 1.442695
    %v1073 = vpow.pop %v1072
    %v1074 = vmul.f32 %v1018, 1.442695
    %v1075 = vpow.pop %v1074
    %v1076 = vmul.f32 %v971, 1.442695
    %v1077 = vpow.pop %v1076
    %v1078 = vmul.f32 %v1020, 1.442695
    %v1079 = vpow.pop %v1078
    %v1080 = vmul.f32 %v974, 1.442695
    %v1081 = vpow.pop %v1080
    %v1082 = vmul.f32 %v1023, 1.442695
    %v1083 = vpow.pop %v1082
    %v1084 = vmul.f32 %v976, 1.442695
    %v1085 = vpow.pop %v1084
    %v1086 = vmul.f32 %v1025, 1.442695
    %v1087 = vpow.pop %v1086
    %v1088 = vmul.f32 %v979, 1.442695
    %v1089 = vpow.pop %v1088
    %v1090 = vmul.f32 %v1028, 1.442695
    %v1091 = vpow.pop %v1090
    %v1092 = vmul.f32 %v981, 1.442695
    %v1093 = vpow.pop %v1092
    %v1094 = vmul.f32 %v1030, 1.442695
    %v1095 = vpow.pop %v1094
    %v1096 = vpack.c.bf16 %v1035, %v1033
    %v1097 = vpack.c.bf16 %v1039, %v1037
    %v1098 = vpack.c.bf16 %v1043, %v1041
    %v1099 = vpack.c.bf16 %v1047, %v1045
    %v1100 = vpack.c.bf16 %v1051, %v1049
    %v1101 = vpack.c.bf16 %v1055, %v1053
    %v1102 = vpack.c.bf16 %v1059, %v1057
    %v1103 = vpack.c.bf16 %v1063, %v1061
    %v1104 = vpack.c.bf16 %v1067, %v1065
    %v1105 = vpack.c.bf16 %v1071, %v1069
    %v1106 = vpack.c.bf16 %v1075, %v1073
    %v1107 = vpack.c.bf16 %v1079, %v1077
    %v1108 = vpack.c.bf16 %v1083, %v1081
    %v1109 = vpack.c.bf16 %v1087, %v1085
    %v1110 = vpack.c.bf16 %v1091, %v1089
    %v1111 = vpack.c.bf16 %v1095, %v1093
    %1112 = vst [vmem:[#allocation2] sm:$0xff] %v1096
    %1113 = vst [vmem:[#allocation2 + $0x8] sm:$0xff] %v1097
    %1114 = vst [vmem:[#allocation2 + $0x10] sm:$0xff] %v1098
    %1115 = vst [vmem:[#allocation2 + $0x18] sm:$0xff] %v1099
    %1116 = vst [vmem:[#allocation2 + $0x20] sm:$0xff] %v1100
    %1117 = vst [vmem:[#allocation2 + $0x28] sm:$0xff] %v1101
    %1118 = vst [vmem:[#allocation2 + $0x30] sm:$0xff] %v1102
    %1119 = vst [vmem:[#allocation2 + $0x38] sm:$0xff] %v1103
    %1120 = vst [vmem:[#allocation2 + $0x40] sm:$0xff] %v1104
    %1121 = vst [vmem:[#allocation2 + $0x48] sm:$0xff] %v1105
    %1122 = vst [vmem:[#allocation2 + $0x50] sm:$0xff] %v1106
    %1123 = vst [vmem:[#allocation2 + $0x58] sm:$0xff] %v1107
    %1124 = vst [vmem:[#allocation2 + $0x60] sm:$0xff] %v1108
    %1125 = vst [vmem:[#allocation2 + $0x68] sm:$0xff] %v1109
    %1126 = vst [vmem:[#allocation2 + $0x70] sm:$0xff] %v1110
    %1127 = vst [vmem:[#allocation2 + $0x78] sm:$0xff] %v1111
    // Predicated region
    $region46: #{deep_count_autoencoder.3} parent=1 // pred_check
      _
    $region47: #{deep_count_autoencoder.3} parent=1 // pred_check_branch
      %1129 = sbr.rel (0) target = $region49
    $region48: #{deep_count_autoencoder.3} parent=1 // pred_region
      %1131 = vsyncadd [#allocation3], 0
      %s1132 = sshll.u32 [#allocation2], 4
      %s1133 = int_to_ptr.vmem [resolvable:$true] %s1132
      %s1134 = sshll.u32 %s11, 4
      %s1135 = int_to_ptr.hbm [resolvable:$true] %s1134
      %1140 = dma.vmem_to_hbm [thread:$0]  %s1133, 2048, %s1135, [#allocation3], 128, 128, 8
    $region49: #{deep_count_autoencoder.3} parent=1 // pred_fallthru
      _
    // Predicated region
    $region50: #{deep_count_autoencoder.3} parent=1 // pred_check
      _
    $region51: #{deep_count_autoencoder.3} parent=1 // pred_check_branch
      %1142 = sbr.rel (0) target = $region53
    $region52: #{deep_count_autoencoder.3} parent=1 // pred_region
      %1144 = dma.done [#allocation3], 2048
    $region53: #{deep_count_autoencoder.3} parent=1 // pred_fallthru
      _
    %1145 = vsyncpa [#allocation3], 1

</llo_original>
